<compile_context>
chip_gen: v5e
topology: v5e:2x2
jax: 0.10.0
libtpu: 0.0.40
codegen_flags: <defaults>
</compile_context>

<pallas_src>
import jax
import jax.numpy as jnp
from jax.experimental import pallas as pl
from jax.experimental.pallas import tpu as pltpu

NUM_CLASSES = 4
ENET_OUT = 1408          # efficientnet_b2 num_features
HID1, HID2 = 512, 256
BN_EPS = 1e-5


def _round_up(x, m):
    return (x + m - 1) // m * m


# -----------------------------------------------------------------------------
# Kernel: stem (pointwise conv, bias folded via the ones channel) -> ReLU ->
# spatial partial sum, accumulated into the grid-resident output block.
# Grid = (batch, spatial tiles); spatial axis MUST stay innermost/"arbitrary"
# (the s==0 init / resident-output accumulate depends on it).
# -----------------------------------------------------------------------------
def stem_pool_kernel(x_ref, w_ref, out_ref):
    # x_ref:   (1, C_aug, TILE_S) bf16  input tile, channels-first (lane = spatial)
    # w_ref:   (F, C_aug)         bf16  stem weight with the bias as last column
    # out_ref: (1, F, 1)          f32   per-image pooled SUM (resident across tiles)
    s = pl.program_id(1)

    @pl.when(s == 0)
    def _init():
        out_ref[...] = jnp.zeros_like(out_ref)

    # Pointwise conv on the MXU (bf16 in, f32 accumulate).  The appended ones
    # channel carries the bias; padded spatial columns are all-zero (including
    # the ones channel) so they remain exactly 0 after the ReLU and cannot
    # contaminate the pooled sum.
    feats = jnp.dot(w_ref[...], x_ref[0],
                    preferred_element_type=jnp.float32)          # (F, TILE_S)
    feats = jnp.maximum(feats, 0.0)

    # AdaptiveAvgPool2d(1): spatial partial sum (the 1/HW scale is applied in XLA).
    out_ref[...] += jnp.sum(feats, axis=1, keepdims=True)[None]


# -----------------------------------------------------------------------------
# Classifier head (tiny matvecs) in plain XLA — eval mode, Dropout = identity.
# -----------------------------------------------------------------------------
def _bn_eval(x, gamma, beta, mean, var):
    return (x - mean) * jax.lax.rsqrt(var + BN_EPS) * gamma + beta


def _classifier_head(pooled, params):
    (_, _,
     g1, be1, m1, v1, w1, b1,
     g2, be2, m2, v2, w2, b2,
     g3, be3, m3, v3, w3, b3) = params
    h = _bn_eval(pooled, g1, be1, m1, v1)
    h = jnp.maximum(h @ w1 + b1, 0.0)
    h = _bn_eval(h, g2, be2, m2, v2)
    h = jnp.maximum(h @ w2 + b2, 0.0)
    h = _bn_eval(h, g3, be3, m3, v3)
    return h @ w3 + b3


# -----------------------------------------------------------------------------
# Wrapper
# -----------------------------------------------------------------------------
def waste_classifier_forward(x_nchw, params, tile_s=None):
    """x_nchw: (N, C, H, W) float -> logits (N, NUM_CLASSES)."""
    N, C, H, W = x_nchw.shape
    HW = H * W
    w_stem, b_stem = params[0], params[1]
    assert w_stem.shape == (C, ENET_OUT) and b_stem.shape == (1, ENET_OUT)

    # Spatial tiling: largest useful tile (cap 2048), pad HW up to a multiple.
    if tile_s is None:
        tile_s = 2048
    tile_s = min(tile_s, _round_up(HW, 128))
    assert tile_s % 128 == 0
    hw_pad = _round_up(HW, tile_s)
    n_tiles = hw_pad // tile_s

    # Input prep (one fused XLA copy): channels-first spatial-flattened, ones
    # channel appended (bias fold + pad mask), zero spatial pad, bf16 stream.
    x3 = x_nchw.reshape(N, C, HW).astype(jnp.float32)
    ones = jnp.ones((N, 1, HW), jnp.float32)
    x_aug = jnp.concatenate([x3, ones], axis=1)                  # (N, C+1, HW)
    x_aug = jnp.pad(x_aug, ((0, 0), (0, 0), (0, hw_pad - HW)))   # zero pad
    x_aug = x_aug.astype(jnp.bfloat16)
    c_aug = C + 1

    # Stem weight with the bias folded in as the last input channel.
    w_aug = jnp.concatenate([w_stem, b_stem], axis=0).T.astype(jnp.bfloat16)  # (F, C+1)

    grid_spec = pltpu.PrefetchScalarGridSpec(
        num_scalar_prefetch=0,
        grid=(N, n_tiles),
        in_specs=[
            pl.BlockSpec((1, c_aug, tile_s), lambda n, s: (n, 0, s)),
            pl.BlockSpec((ENET_OUT, c_aug), lambda n, s: (0, 0)),   # resident weight
        ],
        out_specs=pl.BlockSpec((1, ENET_OUT, 1), lambda n, s: (n, 0, 0)),
    )

    pooled_sum = pl.pallas_call(
        stem_pool_kernel,
        out_shape=jax.ShapeDtypeStruct((N, ENET_OUT, 1), jnp.float32),
        grid_spec=grid_spec,
        compiler_params=pltpu.CompilerParams(
            dimension_semantics=("parallel", "arbitrary"),
            vmem_limit_bytes=48 * 1024 * 1024,   # feats temp (<=11.5 MB @2048) + buffers
        ),
    )(x_aug, w_aug)

    # Padded columns contributed exactly 0, so divide by the TRUE H*W.
    pooled = pooled_sum.reshape(N, ENET_OUT) * (1.0 / HW)
    return _classifier_head(pooled, params)


# -----------------------------------------------------------------------------
# Parameter init + pure-JAX reference (mirrors the kernel's bf16 stem operands,
# fp32 accumulation everywhere) for checking.
# -----------------------------------------------------------------------------
def init_params(key, c_in):
    keys = jax.random.split(key, 7)

    def lin(k, fan_in, fan_out):
        bound = 1.0 / (fan_in ** 0.5)
        kw, kb = jax.random.split(k)
        w = jax.random.uniform(kw, (fan_in, fan_out), jnp.float32, -bound, bound)
        b = jax.random.uniform(kb, (1, fan_out), jnp.float32, -bound, bound)
        return w, b

    def bn(k, f):
        kg, kb, km, kv = jax.random.split(k, 4)
        gamma = 1.0 + 0.1 * jax.random.normal(kg, (1, f), jnp.float32)
        beta = 0.1 * jax.random.normal(kb, (1, f), jnp.float32)
        mean = 0.1 * jax.random.normal(km, (1, f), jnp.float32)
        var = jnp.abs(1.0 + 0.1 * jax.random.normal(kv, (1, f), jnp.float32))
        return gamma, beta, mean, var

    w_stem, b_stem = lin(keys[0], c_in, ENET_OUT)
    g1, be1, m1, v1 = bn(keys[1], ENET_OUT)
    w1, b1 = lin(keys[2], ENET_OUT, HID1)
    g2, be2, m2, v2 = bn(keys[3], HID1)
    w2, b2 = lin(keys[4], HID1, HID2)
    g3, be3, m3, v3 = bn(keys[5], HID2)
    w3, b3 = lin(keys[6], HID2, NUM_CLASSES)
    return (w_stem, b_stem,
            g1, be1, m1, v1, w1, b1,
            g2, be2, m2, v2, w2, b2,
            g3, be3, m3, v3, w3, b3)


def reference_forward(x_nchw, params):
    w_stem, b_stem = params[0], params[1]
    N, C, H, W = x_nchw.shape
    x3 = x_nchw.reshape(N, C, H * W).astype(jnp.bfloat16)
    feats = jnp.einsum('ncs,cf->nsf', x3, w_stem.astype(jnp.bfloat16),
                       preferred_element_type=jnp.float32)
    feats = feats + b_stem.astype(jnp.bfloat16).astype(jnp.float32)[None]
    feats = jnp.maximum(feats, 0.0)
    pooled = feats.mean(axis=1)                                   # (N, F)
    return _classifier_head(pooled, params)


if __name__ == "__main__":
    key = jax.random.PRNGKey(0)
    kx1, kx2, kp = jax.random.split(key, 3)

    # Case 1: HW = 256 divisible by the tile; tile_s=128 forces 2 spatial tiles
    # per image, exercising init / accumulate across grid steps.
    x1 = jax.random.normal(kx1, (2, 4, 16, 16), jnp.float32)
    params1 = init_params(kp, c_in=4)
    logits1 = waste_classifier_forward(x1, params1, tile_s=128)
    jax.block_until_ready(logits1)
    ref1 = reference_forward(x1, params1)
    assert logits1.shape == (2, NUM_CLASSES)
    assert jnp.allclose(logits1, ref1, rtol=2e-3, atol=2e-3), \
        float(jnp.max(jnp.abs(logits1 - ref1)))

    # Case 2: HW = 18*18 = 324 is NOT a multiple of 128 -> exercises the padded,
    # ones-masked pooling path (3 tiles of 128; the last tile has 60 pad columns).
    x2 = jax.random.normal(kx2, (2, 3, 18, 18), jnp.float32)
    params2 = init_params(kp, c_in=3)
    logits2 = waste_classifier_forward(x2, params2, tile_s=128)
    jax.block_until_ready(logits2)
    ref2 = reference_forward(x2, params2)
    assert logits2.shape == (2, NUM_CLASSES)
    assert jnp.allclose(logits2, ref2, rtol=2e-3, atol=2e-3), \
        float(jnp.max(jnp.abs(logits2 - ref2)))

    print("KERNEL_OK")
</pallas_src>

<mosaic_0001>
module attributes {stable_mosaic.version = 11 : i64} {
  func.func @stem_pool_kernel(%arg0: i32, %arg1: i32, %arg2: memref<1x5x128xbf16, #tpu.memory_space<vmem>>, %arg3: memref<1408x5xbf16, #tpu.memory_space<vmem>>, %arg4: memref<1x1408x1xf32, #tpu.memory_space<vmem>>) attributes {dimension_semantics = [#tpu.dimension_semantics<parallel>, #tpu.dimension_semantics<arbitrary>], iteration_bounds = array<i64: 2, 2>, scalar_prefetch = 0 : i64, scratch_operands = 0 : i64, tpu.core_type = #tpu.core_type<tc>, window_params = [{transform_indices = @transform_0, window_bounds = array<i64: 1, 5, 128>}, {pipeline_mode = #tpu.pipeline_mode<synchronous>, transform_indices = @transform_1, window_bounds = array<i64: 1408, 5>}, {transform_indices = @transform_2, window_bounds = array<i64: 1, 1408, 1>}]} {
    %c0_i32 = arith.constant 0 : i32
    %0 = arith.cmpi eq, %arg1, %c0_i32 : i32
    %1 = arith.extui %0 : i1 to i32
    %c0_i32_0 = arith.constant 0 : i32
    %2 = arith.cmpi ne, %1, %c0_i32_0 : i32
    scf.if %2 {
      %cst_13 = arith.constant 0.000000e+00 : f32
      %15 = vector.broadcast %cst_13 : f32 to vector<1x1408x1xf32>
      %c0_14 = arith.constant 0 : index
      %c0_15 = arith.constant 0 : index
      %c0_16 = arith.constant 0 : index
      %16 = vector.load %arg4[%c0_14, %c0_15, %c0_16] : memref<1x1408x1xf32, #tpu.memory_space<vmem>>, vector<1x1408x1xf32>
      tpu.vector_store %arg4[%c0_14, %c0_15, %c0_16], %15 {strides = array<i32>} : memref<1x1408x1xf32, #tpu.memory_space<vmem>>, vector<1x1408x1xf32>,
    } else {
    }
    %c0 = arith.constant 0 : index
    %c0_1 = arith.constant 0 : index
    %3 = vector.load %arg3[%c0, %c0_1] : memref<1408x5xbf16, #tpu.memory_space<vmem>>, vector<1408x5xbf16>
    %c0_2 = arith.constant 0 : index
    %c0_3 = arith.constant 0 : index
    %c0_4 = arith.constant 0 : index
    %4 = vector.load %arg2[%c0_2, %c0_3, %c0_4] : memref<1x5x128xbf16, #tpu.memory_space<vmem>>, vector<1x5x128xbf16>
    %5 = vector.shape_cast %4 : vector<1x5x128xbf16> to vector<5x128xbf16>
    %cst = arith.constant dense<0.000000e+00> : vector<1408x128xf32>
    %6 = tpu.matmul %3, %5, %cst {dimension_numbers = #tpu.dot_dimension_numbers<[1], [0], [0], [1], [0, 0, 1, 1], [], []>} : vector<1408x5xbf16>, vector<5x128xbf16>, vector<1408x128xf32> -> vector<1408x128xf32>
    %cst_5 = arith.constant 0.000000e+00 : f32
    %7 = vector.broadcast %cst_5 : f32 to vector<1408x128xf32>
    %8 = arith.maximumf %6, %7 : vector<1408x128xf32>
    %c0_6 = arith.constant 0 : index
    %c0_7 = arith.constant 0 : index
    %c0_8 = arith.constant 0 : index
    %9 = vector.load %arg4[%c0_6, %c0_7, %c0_8] : memref<1x1408x1xf32, #tpu.memory_space<vmem>>, vector<1x1408x1xf32>
    %cst_9 = arith.constant dense<0.000000e+00> : vector<1408xf32>
    %10 = vector.multi_reduction <add>, %8, %cst_9 [1] : vector<1408x128xf32> to vector<1408xf32>
    %11 = vector.shape_cast %10 : vector<1408xf32> to vector<1408x1xf32>
    %12 = vector.shape_cast %11 : vector<1408x1xf32> to vector<1x1408x1xf32>
    %13 = arith.addf %9, %12 : vector<1x1408x1xf32>
    %c0_10 = arith.constant 0 : index
    %c0_11 = arith.constant 0 : index
    %c0_12 = arith.constant 0 : index
    %14 = vector.load %arg4[%c0_10, %c0_11, %c0_12] : memref<1x1408x1xf32, #tpu.memory_space<vmem>>, vector<1x1408x1xf32>
    tpu.vector_store %arg4[%c0_10, %c0_11, %c0_12], %13 {strides = array<i32>} : memref<1x1408x1xf32, #tpu.memory_space<vmem>>, vector<1x1408x1xf32>,
    return
  }
  func.func @transform_0(%arg0: i32, %arg1: i32) -> (i32, i32, i32) {
    %c0_i32 = arith.constant 0 : i32
    %c0_i32_0 = arith.constant 0 : i32
    return %arg0, %c0_i32, %arg1 : i32, i32, i32
  }
  func.func @transform_1(%arg0: i32, %arg1: i32) -> (i32, i32) {
    %c0_i32 = arith.constant 0 : i32
    %c0_i32_0 = arith.constant 0 : i32
    %c0_i32_1 = arith.constant 0 : i32
    return %c0_i32, %c0_i32_0 : i32, i32
  }
  func.func @transform_2(%arg0: i32, %arg1: i32) -> (i32, i32, i32) {
    %c0_i32 = arith.constant 0 : i32
    %c0_i32_0 = arith.constant 0 : i32
    %c0_i32_1 = arith.constant 0 : i32
    return %arg0, %c0_i32, %c0_i32_0 : i32, i32, i32
  }
}

</mosaic_0001>

<llo_original>
// kernel: tpu_custom_call.1
$region0: #{tpu_custom_call.1}
  #allocation0 [shape = 'u32[]', space=smem, size = 0x4, offset = 0x4, fixed_abs, tag = 'smem constant byte address 0x4 - core index']
  #allocation1 [shape = 'u32[72,128]{1,0:T(1,128)}', space=vmem, size = 0x9000, scoped, tag = 'internal scratch']
  %s0 = inlined_call_operand.vmem [shape: bf16[2,5,256], index: 0, kind: input, shape index: {}]
  %s1 = inlined_call_operand.vmem [shape: bf16[1408,5], index: 1, kind: input, shape index: {}]
  %s2 = inlined_call_operand.vmem [shape: f32[2,1408,1], index: 2, kind: output, shape index: {}]
  %s3 = sld [smem:[#allocation0]]
  $region45: #{tpu_custom_call.1} parent=0
    _
  %s5 = ssub.s32 1, %s3
  %s6 = scalar_select 0, %s5, %s3
  loop: start=0, step=1, limit=6
  $region2: #{tpu_custom_call.1} parent=0 // loop_pre_header
    _
  $region3: #{tpu_custom_call.1} parent=0 // loop_header
    %s8 = sphi 0, %s12
    %p9 = scmp.ge.s32.totalorder %s8, 6
    %s15 = sphi 0, %s27
    %s16 = sphi 0, %s23
    %s17 = sphi 0, %s15
    %s18 = sphi 0, %s16
    %s19 = sphi 0, %s17
    %s20 = sphi 0, %s18
    %s32 = sphi 0, %s34
    %s35 = sphi 0, %s32
    %s36 = sphi 0, %s35
    %s52 = sphi 0, %s36
    %s56 = sphi 0, %s56
    %s58 = sphi 0, %s56
    %s59 = sphi 0, %s58
    %s73 = sphi 0, %s59
    %s79 = sphi 0, %s81
    %s82 = sphi 0, %s79
    %s83 = sphi 0, %s82
    %s99 = sphi 0, %s83
  $region4: #{tpu_custom_call.1} parent=0 // loop_header_branch
    %11 = sbr.rel (%p9) target = $region8
  $region5: #{tpu_custom_call.1} parent=0 // loop_body
    %s13 = ssub.s32 %s8, 1
    %s14 = ssub.s32 %s8, 2
    %s21 = sadd.s32 1, %s16
    %p22 = scmp.ge.s32.totalorder %s21, 2
    %s23 = scalar_select %p22, 0, %s21
    %s24 = sadd.s32 1, %s15
    %s25 = scalar_select %p22, %s24, %s15
    %p26 = scmp.ge.s32.totalorder %s25, 2
    %s27 = scalar_select %p26, 0, %s25
    %s28 = ssub.s32 %s15, %s27
    %s29 = ssub.s32 %s16, %s23
    %s30 = sor.u32 %s28, %s29
    %p31 = scmp.eq.s32.totalorder %s30, 0
    %s33 = sadd.s32 %s32, 1
    %s34 = scalar_select %p31, %s32, %s33
    %p37 = pneg %p31
    %p38 = scmp.eq.s32.totalorder %s8, 3
    %p39 = por %p37, %p38
    %p40 = scmp.ne.s32.totalorder %s32, %s35
    %p41 = scmp.eq.s32.totalorder %s8, 0
    %p42 = por %p40, %p41
    %p43 = scmp.ne.s32.totalorder %s32, %s35
    %p44 = scmp.eq.s32.totalorder %s13, 3
    %p45 = por %p43, %p44
    %p46 = scmp.ne.s32.totalorder %s35, %s36
    %p47 = scmp.eq.s32.totalorder %s13, 0
    %p48 = por %p46, %p47
    %p49 = scmp.ne.s32.totalorder %s35, %s36
    %p50 = scmp.eq.s32.totalorder %s14, 3
    %p51 = por %p49, %p50
    %p53 = scmp.ne.s32.totalorder %s36, %s52
    %p54 = scmp.eq.s32.totalorder %s14, 0
    %p55 = por %p53, %p54
    %s57 = sadd.s32 %s56, 1
    %p60 = scmp.eq.s32.totalorder %s8, 3
    %p61 = scmp.ne.s32.totalorder %s56, %s58
    %p62 = scmp.eq.s32.totalorder %s8, 0
    %p63 = por %p61, %p62
    %p64 = scmp.ne.s32.totalorder %s56, %s58
    %p65 = scmp.eq.s32.totalorder %s13, 3
    %p66 = por %p64, %p65
    %p67 = scmp.ne.s32.totalorder %s58, %s59
    %p68 = scmp.eq.s32.totalorder %s13, 0
    %p69 = por %p67, %p68
    %p70 = scmp.ne.s32.totalorder %s58, %s59
    %p71 = scmp.eq.s32.totalorder %s14, 3
    %p72 = por %p70, %p71
    %p74 = scmp.ne.s32.totalorder %s59, %s73
    %p75 = scmp.eq.s32.totalorder %s14, 0
    %p76 = por %p74, %p75
    %s77 = ssub.s32 %s15, %s27
    %p78 = scmp.eq.s32.totalorder %s77, 0
    %s80 = sadd.s32 %s79, 1
    %s81 = scalar_select %p78, %s79, %s80
    %p84 = pneg %p78
    %p85 = scmp.eq.s32.totalorder %s8, 3
    %p86 = por %p84, %p85
    %p87 = scmp.ne.s32.totalorder %s79, %s82
    %p88 = scmp.eq.s32.totalorder %s8, 0
    %p89 = por %p87, %p88
    %p90 = scmp.ne.s32.totalorder %s79, %s82
    %p91 = scmp.eq.s32.totalorder %s13, 3
    %p92 = por %p90, %p91
    %p93 = scmp.ne.s32.totalorder %s82, %s83
    %p94 = scmp.eq.s32.totalorder %s13, 0
    %p95 = por %p93, %p94
    %p96 = scmp.ne.s32.totalorder %s82, %s83
    %p97 = scmp.eq.s32.totalorder %s14, 3
    %p98 = por %p96, %p97
    %p100 = scmp.ne.s32.totalorder %s83, %s99
    %p101 = scmp.eq.s32.totalorder %s14, 0
    %p102 = por %p100, %p101
    %p103 = scmp.le.s32.totalorder 1, %s8
    %p104 = scmp.lt.s32.totalorder %s8, 5
    %p105 = pnand %p103, %p104
    %p106 = pneg %p105
    // Predicated region
    $region9: #{tpu_custom_call.1} parent=5 // pred_check
      _
    $region10: #{tpu_custom_call.1} parent=5 // pred_check_branch
      %108 = sbr.rel (%p105) target = $region12
    $region11: #{tpu_custom_call.1} parent=5 // pred_region
      %s109 = ssub.s32 %s8, 1
      // Predicated region
      $region13: #{tpu_custom_call.1} parent=11 // pred_check
        %p110 = pneg %p69
      $region14: #{tpu_custom_call.1} parent=11 // pred_check_branch
        %112 = sbr.rel (%p110) target = $region16
      $region15: #{tpu_custom_call.1} parent=11 // pred_region
        _
      $region16: #{tpu_custom_call.1} parent=11 // pred_fallthru
        _
    $region12: #{tpu_custom_call.1} parent=5 // pred_fallthru
      _
    %p113 = scmp.lt.s32.totalorder %s8, 4
    // Predicated region
    $region17: #{tpu_custom_call.1} parent=5 // pred_check
      %p114 = pneg %p113
    $region18: #{tpu_custom_call.1} parent=5 // pred_check_branch
      %116 = sbr.rel (%p114) target = $region20
    $region19: #{tpu_custom_call.1} parent=5 // pred_region
      // Predicated region
      $region21: #{tpu_custom_call.1} parent=19 // pred_check
        %p117 = pneg %p42
      $region22: #{tpu_custom_call.1} parent=19 // pred_check_branch
        %119 = sbr.rel (%p117) target = $region24
      $region23: #{tpu_custom_call.1} parent=19 // pred_region
        %p120 = scmp.lt.s32.totalorder %s15, 1
        %s121 = scalar_select %p120, %s15, 1
        %p122 = scmp.lt.s32.totalorder %s16, 1
        %s123 = scalar_select %p122, %s16, 1
        %s124 = smul.addr %s121, 2
        %s125 = sadd.s32 %s123, %s124
        %s126 = smul.addr %s125, 4
        %s127 = scalar_lea.vmem %s0, %s126
      $region24: #{tpu_custom_call.1} parent=19 // pred_fallthru
        _
    $region20: #{tpu_custom_call.1} parent=5 // pred_fallthru
      _
    %p128 = scmp.le.s32.totalorder 1, %s8
    %p129 = scmp.lt.s32.totalorder %s8, 5
    %p130 = pnand %p128, %p129
    %p131 = pneg %p130
    // Predicated region
    $region25: #{tpu_custom_call.1} parent=5 // pred_check
      _
    $region26: #{tpu_custom_call.1} parent=5 // pred_check_branch
      %133 = sbr.rel (%p130) target = $region28
    $region27: #{tpu_custom_call.1} parent=5 // pred_region
      %s134 = ssub.s32 %s8, 1
      %p135 = scmp.lt.s32.totalorder %s17, 1
      %s136 = scalar_select %p135, %s17, 1
      %p137 = scmp.lt.s32.totalorder %s18, 1
      %s138 = scalar_select %p137, %s18, 1
      %s139 = smul.addr %s136, 2
      %s140 = sadd.s32 %s138, %s139
      %s141 = smul.addr %s140, 4
      %s142 = scalar_lea.vmem %s0, %s141
      %p143 = pneg %p48
      %p144 = pneg %p45
      %p145 = pneg %p69
      %p146 = pneg %p66
      %p147 = pneg %p95
      %p148 = pneg %p92
      %p149 = scmp.lt.s32.totalorder %s17, 1
      %s150 = scalar_select %p149, %s17, 1
      %s151 = smul.addr %s150, 176
      %s152 = smul.addr %s151, 8
      %s153 = scalar_lea.vmem %s2, %s152
      %p154 = scmp.lt.s32.totalorder %s17, 1
      %s155 = scalar_select %p154, %s17, 1
      %p156 = scmp.lt.s32.totalorder %s18, 1
      %s157 = scalar_select %p156, %s18, 1
      %s158 = smul.addr %s155, 2
      %s159 = sadd.s32 %s157, %s158
      %s160 = smul.addr %s159, 4
      %s161 = scalar_lea.vmem %s0, %s160
      %p162 = scmp.lt.s32.totalorder %s17, 1
      %s163 = scalar_select %p162, %s17, 1
      %s164 = smul.addr %s163, 176
      %s165 = smul.addr %s164, 8
      %s166 = scalar_lea.vmem %s2, %s165
      %p168 = scmp.eq.s32.totalorder %s18, 0
      // Predicated region
      $region29: #{tpu_custom_call.1} parent=27 // pred_check
        %p169 = pneg %p168
      $region30: #{tpu_custom_call.1} parent=27 // pred_check_branch
        %171 = sbr.rel (%p169) target = $region32
      $region31: #{tpu_custom_call.1} parent=27 // pred_region
        %vm172 = vcmask 7168
        %173 = vst.msk [vmem:[%s166] sm:$0xff] %vm172, 0.0
        %174 = vst.msk [vmem:[%s166 + $0x8] sm:$0xff] %vm172, 0.0
        %175 = vst.msk [vmem:[%s166 + $0x10] sm:$0xff] %vm172, 0.0
        %176 = vst.msk [vmem:[%s166 + $0x18] sm:$0xff] %vm172, 0.0
        %177 = vst.msk [vmem:[%s166 + $0x20] sm:$0xff] %vm172, 0.0
        %178 = vst.msk [vmem:[%s166 + $0x28] sm:$0xff] %vm172, 0.0
        %179 = vst.msk [vmem:[%s166 + $0x30] sm:$0xff] %vm172, 0.0
        %180 = vst.msk [vmem:[%s166 + $0x38] sm:$0xff] %vm172, 0.0
        %181 = vst.msk [vmem:[%s166 + $0x40] sm:$0xff] %vm172, 0.0
        %182 = vst.msk [vmem:[%s166 + $0x48] sm:$0xff] %vm172, 0.0
        %183 = vst.msk [vmem:[%s166 + $0x50] sm:$0xff] %vm172, 0.0
        %184 = vst.msk [vmem:[%s166 + $0x58] sm:$0xff] %vm172, 0.0
        %185 = vst.msk [vmem:[%s166 + $0x60] sm:$0xff] %vm172, 0.0
        %186 = vst.msk [vmem:[%s166 + $0x68] sm:$0xff] %vm172, 0.0
        %187 = vst.msk [vmem:[%s166 + $0x70] sm:$0xff] %vm172, 0.0
        %188 = vst.msk [vmem:[%s166 + $0x78] sm:$0xff] %vm172, 0.0
        %189 = vst.msk [vmem:[%s166 + $0x80] sm:$0xff] %vm172, 0.0
        %190 = vst.msk [vmem:[%s166 + $0x88] sm:$0xff] %vm172, 0.0
        %191 = vst.msk [vmem:[%s166 + $0x90] sm:$0xff] %vm172, 0.0
        %192 = vst.msk [vmem:[%s166 + $0x98] sm:$0xff] %vm172, 0.0
        %193 = vst.msk [vmem:[%s166 + $0xa0] sm:$0xff] %vm172, 0.0
        %194 = vst.msk [vmem:[%s166 + $0xa8] sm:$0xff] %vm172, 0.0
        %195 = vst.msk [vmem:[%s166 + $0xb0] sm:$0xff] %vm172, 0.0
        %196 = vst.msk [vmem:[%s166 + $0xb8] sm:$0xff] %vm172, 0.0
        %197 = vst.msk [vmem:[%s166 + $0xc0] sm:$0xff] %vm172, 0.0
        %198 = vst.msk [vmem:[%s166 + $0xc8] sm:$0xff] %vm172, 0.0
        %199 = vst.msk [vmem:[%s166 + $0xd0] sm:$0xff] %vm172, 0.0
        %200 = vst.msk [vmem:[%s166 + $0xd8] sm:$0xff] %vm172, 0.0
        %201 = vst.msk [vmem:[%s166 + $0xe0] sm:$0xff] %vm172, 0.0
        %202 = vst.msk [vmem:[%s166 + $0xe8] sm:$0xff] %vm172, 0.0
        %203 = vst.msk [vmem:[%s166 + $0xf0] sm:$0xff] %vm172, 0.0
        %204 = vst.msk [vmem:[%s166 + $0xf8] sm:$0xff] %vm172, 0.0
        %205 = vst.msk [vmem:[%s166 + $0x100] sm:$0xff] %vm172, 0.0
        %206 = vst.msk [vmem:[%s166 + $0x108] sm:$0xff] %vm172, 0.0
        %207 = vst.msk [vmem:[%s166 + $0x110] sm:$0xff] %vm172, 0.0
        %208 = vst.msk [vmem:[%s166 + $0x118] sm:$0xff] %vm172, 0.0
        %209 = vst.msk [vmem:[%s166 + $0x120] sm:$0xff] %vm172, 0.0
        %210 = vst.msk [vmem:[%s166 + $0x128] sm:$0xff] %vm172, 0.0
        %211 = vst.msk [vmem:[%s166 + $0x130] sm:$0xff] %vm172, 0.0
        %212 = vst.msk [vmem:[%s166 + $0x138] sm:$0xff] %vm172, 0.0
        %213 = vst.msk [vmem:[%s166 + $0x140] sm:$0xff] %vm172, 0.0
        %214 = vst.msk [vmem:[%s166 + $0x148] sm:$0xff] %vm172, 0.0
        %215 = vst.msk [vmem:[%s166 + $0x150] sm:$0xff] %vm172, 0.0
        %216 = vst.msk [vmem:[%s166 + $0x158] sm:$0xff] %vm172, 0.0
        %217 = vst.msk [vmem:[%s166 + $0x160] sm:$0xff] %vm172, 0.0
        %218 = vst.msk [vmem:[%s166 + $0x168] sm:$0xff] %vm172, 0.0
        %219 = vst.msk [vmem:[%s166 + $0x170] sm:$0xff] %vm172, 0.0
        %220 = vst.msk [vmem:[%s166 + $0x178] sm:$0xff] %vm172, 0.0
        %221 = vst.msk [vmem:[%s166 + $0x180] sm:$0xff] %vm172, 0.0
        %222 = vst.msk [vmem:[%s166 + $0x188] sm:$0xff] %vm172, 0.0
        %223 = vst.msk [vmem:[%s166 + $0x190] sm:$0xff] %vm172, 0.0
        %224 = vst.msk [vmem:[%s166 + $0x198] sm:$0xff] %vm172, 0.0
        %225 = vst.msk [vmem:[%s166 + $0x1a0] sm:$0xff] %vm172, 0.0
        %226 = vst.msk [vmem:[%s166 + $0x1a8] sm:$0xff] %vm172, 0.0
        %227 = vst.msk [vmem:[%s166 + $0x1b0] sm:$0xff] %vm172, 0.0
        %228 = vst.msk [vmem:[%s166 + $0x1b8] sm:$0xff] %vm172, 0.0
        %229 = vst.msk [vmem:[%s166 + $0x1c0] sm:$0xff] %vm172, 0.0
        %230 = vst.msk [vmem:[%s166 + $0x1c8] sm:$0xff] %vm172, 0.0
        %231 = vst.msk [vmem:[%s166 + $0x1d0] sm:$0xff] %vm172, 0.0
        %232 = vst.msk [vmem:[%s166 + $0x1d8] sm:$0xff] %vm172, 0.0
        %233 = vst.msk [vmem:[%s166 + $0x1e0] sm:$0xff] %vm172, 0.0
        %234 = vst.msk [vmem:[%s166 + $0x1e8] sm:$0xff] %vm172, 0.0
        %235 = vst.msk [vmem:[%s166 + $0x1f0] sm:$0xff] %vm172, 0.0
        %236 = vst.msk [vmem:[%s166 + $0x1f8] sm:$0xff] %vm172, 0.0
        %237 = vst.msk [vmem:[%s166 + $0x200] sm:$0xff] %vm172, 0.0
        %238 = vst.msk [vmem:[%s166 + $0x208] sm:$0xff] %vm172, 0.0
        %239 = vst.msk [vmem:[%s166 + $0x210] sm:$0xff] %vm172, 0.0
        %240 = vst.msk [vmem:[%s166 + $0x218] sm:$0xff] %vm172, 0.0
        %241 = vst.msk [vmem:[%s166 + $0x220] sm:$0xff] %vm172, 0.0
        %242 = vst.msk [vmem:[%s166 + $0x228] sm:$0xff] %vm172, 0.0
        %243 = vst.msk [vmem:[%s166 + $0x230] sm:$0xff] %vm172, 0.0
        %244 = vst.msk [vmem:[%s166 + $0x238] sm:$0xff] %vm172, 0.0
        %245 = vst.msk [vmem:[%s166 + $0x240] sm:$0xff] %vm172, 0.0
        %246 = vst.msk [vmem:[%s166 + $0x248] sm:$0xff] %vm172, 0.0
        %247 = vst.msk [vmem:[%s166 + $0x250] sm:$0xff] %vm172, 0.0
        %248 = vst.msk [vmem:[%s166 + $0x258] sm:$0xff] %vm172, 0.0
        %249 = vst.msk [vmem:[%s166 + $0x260] sm:$0xff] %vm172, 0.0
        %250 = vst.msk [vmem:[%s166 + $0x268] sm:$0xff] %vm172, 0.0
        %251 = vst.msk [vmem:[%s166 + $0x270] sm:$0xff] %vm172, 0.0
        %252 = vst.msk [vmem:[%s166 + $0x278] sm:$0xff] %vm172, 0.0
        %253 = vst.msk [vmem:[%s166 + $0x280] sm:$0xff] %vm172, 0.0
        %254 = vst.msk [vmem:[%s166 + $0x288] sm:$0xff] %vm172, 0.0
        %255 = vst.msk [vmem:[%s166 + $0x290] sm:$0xff] %vm172, 0.0
        %256 = vst.msk [vmem:[%s166 + $0x298] sm:$0xff] %vm172, 0.0
        %257 = vst.msk [vmem:[%s166 + $0x2a0] sm:$0xff] %vm172, 0.0
        %258 = vst.msk [vmem:[%s166 + $0x2a8] sm:$0xff] %vm172, 0.0
        %259 = vst.msk [vmem:[%s166 + $0x2b0] sm:$0xff] %vm172, 0.0
        %260 = vst.msk [vmem:[%s166 + $0x2b8] sm:$0xff] %vm172, 0.0
        %261 = vst.msk [vmem:[%s166 + $0x2c0] sm:$0xff] %vm172, 0.0
        %262 = vst.msk [vmem:[%s166 + $0x2c8] sm:$0xff] %vm172, 0.0
        %263 = vst.msk [vmem:[%s166 + $0x2d0] sm:$0xff] %vm172, 0.0
        %264 = vst.msk [vmem:[%s166 + $0x2d8] sm:$0xff] %vm172, 0.0
        %265 = vst.msk [vmem:[%s166 + $0x2e0] sm:$0xff] %vm172, 0.0
        %266 = vst.msk [vmem:[%s166 + $0x2e8] sm:$0xff] %vm172, 0.0
        %267 = vst.msk [vmem:[%s166 + $0x2f0] sm:$0xff] %vm172, 0.0
        %268 = vst.msk [vmem:[%s166 + $0x2f8] sm:$0xff] %vm172, 0.0
        %269 = vst.msk [vmem:[%s166 + $0x300] sm:$0xff] %vm172, 0.0
        %270 = vst.msk [vmem:[%s166 + $0x308] sm:$0xff] %vm172, 0.0
        %271 = vst.msk [vmem:[%s166 + $0x310] sm:$0xff] %vm172, 0.0
        %272 = vst.msk [vmem:[%s166 + $0x318] sm:$0xff] %vm172, 0.0
        %273 = vst.msk [vmem:[%s166 + $0x320] sm:$0xff] %vm172, 0.0
        %274 = vst.msk [vmem:[%s166 + $0x328] sm:$0xff] %vm172, 0.0
        %275 = vst.msk [vmem:[%s166 + $0x330] sm:$0xff] %vm172, 0.0
        %276 = vst.msk [vmem:[%s166 + $0x338] sm:$0xff] %vm172, 0.0
        %277 = vst.msk [vmem:[%s166 + $0x340] sm:$0xff] %vm172, 0.0
        %278 = vst.msk [vmem:[%s166 + $0x348] sm:$0xff] %vm172, 0.0
        %279 = vst.msk [vmem:[%s166 + $0x350] sm:$0xff] %vm172, 0.0
        %280 = vst.msk [vmem:[%s166 + $0x358] sm:$0xff] %vm172, 0.0
        %281 = vst.msk [vmem:[%s166 + $0x360] sm:$0xff] %vm172, 0.0
        %282 = vst.msk [vmem:[%s166 + $0x368] sm:$0xff] %vm172, 0.0
        %283 = vst.msk [vmem:[%s166 + $0x370] sm:$0xff] %vm172, 0.0
        %284 = vst.msk [vmem:[%s166 + $0x378] sm:$0xff] %vm172, 0.0
        %285 = vst.msk [vmem:[%s166 + $0x380] sm:$0xff] %vm172, 0.0
        %286 = vst.msk [vmem:[%s166 + $0x388] sm:$0xff] %vm172, 0.0
        %287 = vst.msk [vmem:[%s166 + $0x390] sm:$0xff] %vm172, 0.0
        %288 = vst.msk [vmem:[%s166 + $0x398] sm:$0xff] %vm172, 0.0
        %289 = vst.msk [vmem:[%s166 + $0x3a0] sm:$0xff] %vm172, 0.0
        %290 = vst.msk [vmem:[%s166 + $0x3a8] sm:$0xff] %vm172, 0.0
        %291 = vst.msk [vmem:[%s166 + $0x3b0] sm:$0xff] %vm172, 0.0
        %292 = vst.msk [vmem:[%s166 + $0x3b8] sm:$0xff] %vm172, 0.0
        %293 = vst.msk [vmem:[%s166 + $0x3c0] sm:$0xff] %vm172, 0.0
        %294 = vst.msk [vmem:[%s166 + $0x3c8] sm:$0xff] %vm172, 0.0
        %295 = vst.msk [vmem:[%s166 + $0x3d0] sm:$0xff] %vm172, 0.0
        %296 = vst.msk [vmem:[%s166 + $0x3d8] sm:$0xff] %vm172, 0.0
        %297 = vst.msk [vmem:[%s166 + $0x3e0] sm:$0xff] %vm172, 0.0
        %298 = vst.msk [vmem:[%s166 + $0x3e8] sm:$0xff] %vm172, 0.0
        %299 = vst.msk [vmem:[%s166 + $0x3f0] sm:$0xff] %vm172, 0.0
        %300 = vst.msk [vmem:[%s166 + $0x3f8] sm:$0xff] %vm172, 0.0
        %301 = vst.msk [vmem:[%s166 + $0x400] sm:$0xff] %vm172, 0.0
        %302 = vst.msk [vmem:[%s166 + $0x408] sm:$0xff] %vm172, 0.0
        %303 = vst.msk [vmem:[%s166 + $0x410] sm:$0xff] %vm172, 0.0
        %304 = vst.msk [vmem:[%s166 + $0x418] sm:$0xff] %vm172, 0.0
        %305 = vst.msk [vmem:[%s166 + $0x420] sm:$0xff] %vm172, 0.0
        %306 = vst.msk [vmem:[%s166 + $0x428] sm:$0xff] %vm172, 0.0
        %307 = vst.msk [vmem:[%s166 + $0x430] sm:$0xff] %vm172, 0.0
        %308 = vst.msk [vmem:[%s166 + $0x438] sm:$0xff] %vm172, 0.0
        %309 = vst.msk [vmem:[%s166 + $0x440] sm:$0xff] %vm172, 0.0
        %310 = vst.msk [vmem:[%s166 + $0x448] sm:$0xff] %vm172, 0.0
        %311 = vst.msk [vmem:[%s166 + $0x450] sm:$0xff] %vm172, 0.0
        %312 = vst.msk [vmem:[%s166 + $0x458] sm:$0xff] %vm172, 0.0
        %313 = vst.msk [vmem:[%s166 + $0x460] sm:$0xff] %vm172, 0.0
        %314 = vst.msk [vmem:[%s166 + $0x468] sm:$0xff] %vm172, 0.0
        %315 = vst.msk [vmem:[%s166 + $0x470] sm:$0xff] %vm172, 0.0
        %316 = vst.msk [vmem:[%s166 + $0x478] sm:$0xff] %vm172, 0.0
        %317 = vst.msk [vmem:[%s166 + $0x480] sm:$0xff] %vm172, 0.0
        %318 = vst.msk [vmem:[%s166 + $0x488] sm:$0xff] %vm172, 0.0
        %319 = vst.msk [vmem:[%s166 + $0x490] sm:$0xff] %vm172, 0.0
        %320 = vst.msk [vmem:[%s166 + $0x498] sm:$0xff] %vm172, 0.0
        %321 = vst.msk [vmem:[%s166 + $0x4a0] sm:$0xff] %vm172, 0.0
        %322 = vst.msk [vmem:[%s166 + $0x4a8] sm:$0xff] %vm172, 0.0
        %323 = vst.msk [vmem:[%s166 + $0x4b0] sm:$0xff] %vm172, 0.0
        %324 = vst.msk [vmem:[%s166 + $0x4b8] sm:$0xff] %vm172, 0.0
        %325 = vst.msk [vmem:[%s166 + $0x4c0] sm:$0xff] %vm172, 0.0
        %326 = vst.msk [vmem:[%s166 + $0x4c8] sm:$0xff] %vm172, 0.0
        %327 = vst.msk [vmem:[%s166 + $0x4d0] sm:$0xff] %vm172, 0.0
        %328 = vst.msk [vmem:[%s166 + $0x4d8] sm:$0xff] %vm172, 0.0
        %329 = vst.msk [vmem:[%s166 + $0x4e0] sm:$0xff] %vm172, 0.0
        %330 = vst.msk [vmem:[%s166 + $0x4e8] sm:$0xff] %vm172, 0.0
        %331 = vst.msk [vmem:[%s166 + $0x4f0] sm:$0xff] %vm172, 0.0
        %332 = vst.msk [vmem:[%s166 + $0x4f8] sm:$0xff] %vm172, 0.0
        %333 = vst.msk [vmem:[%s166 + $0x500] sm:$0xff] %vm172, 0.0
        %334 = vst.msk [vmem:[%s166 + $0x508] sm:$0xff] %vm172, 0.0
        %335 = vst.msk [vmem:[%s166 + $0x510] sm:$0xff] %vm172, 0.0
        %336 = vst.msk [vmem:[%s166 + $0x518] sm:$0xff] %vm172, 0.0
        %337 = vst.msk [vmem:[%s166 + $0x520] sm:$0xff] %vm172, 0.0
        %338 = vst.msk [vmem:[%s166 + $0x528] sm:$0xff] %vm172, 0.0
        %339 = vst.msk [vmem:[%s166 + $0x530] sm:$0xff] %vm172, 0.0
        %340 = vst.msk [vmem:[%s166 + $0x538] sm:$0xff] %vm172, 0.0
        %341 = vst.msk [vmem:[%s166 + $0x540] sm:$0xff] %vm172, 0.0
        %342 = vst.msk [vmem:[%s166 + $0x548] sm:$0xff] %vm172, 0.0
        %343 = vst.msk [vmem:[%s166 + $0x550] sm:$0xff] %vm172, 0.0
        %344 = vst.msk [vmem:[%s166 + $0x558] sm:$0xff] %vm172, 0.0
        %345 = vst.msk [vmem:[%s166 + $0x560] sm:$0xff] %vm172, 0.0
        %346 = vst.msk [vmem:[%s166 + $0x568] sm:$0xff] %vm172, 0.0
        %347 = vst.msk [vmem:[%s166 + $0x570] sm:$0xff] %vm172, 0.0
        %348 = vst.msk [vmem:[%s166 + $0x578] sm:$0xff] %vm172, 0.0
      $region32: #{tpu_custom_call.1} parent=27 // pred_fallthru
        _
      %v349 = vld [vmem:[%s1] sm:$0xf]
      %v350 = vld [vmem:[%s1 + $0x4] sm:$0xf]
      %v351 = vld [vmem:[%s1 + $0x8] sm:$0xf]
      %v352 = vld [vmem:[%s1 + $0xc] sm:$0xf]
      %v353 = vld [vmem:[%s1 + $0x10] sm:$0xf]
      %v354 = vld [vmem:[%s1 + $0x14] sm:$0xf]
      %v355 = vld [vmem:[%s1 + $0x18] sm:$0xf]
      %v356 = vld [vmem:[%s1 + $0x1c] sm:$0xf]
      %v357 = vld [vmem:[%s1 + $0x20] sm:$0xf]
      %v358 = vld [vmem:[%s1 + $0x24] sm:$0xf]
      %v359 = vld [vmem:[%s1 + $0x28] sm:$0xf]
      %v360 = vld [vmem:[%s1 + $0x2c] sm:$0xf]
      %v361 = vld [vmem:[%s1 + $0x30] sm:$0xf]
      %v362 = vld [vmem:[%s1 + $0x34] sm:$0xf]
      %v363 = vld [vmem:[%s1 + $0x38] sm:$0xf]
      %v364 = vld [vmem:[%s1 + $0x3c] sm:$0xf]
      %v365 = vld [vmem:[%s1 + $0x40] sm:$0xf]
      %v366 = vld [vmem:[%s1 + $0x44] sm:$0xf]
      %v367 = vld [vmem:[%s1 + $0x48] sm:$0xf]
      %v368 = vld [vmem:[%s1 + $0x4c] sm:$0xf]
      %v369 = vld [vmem:[%s1 + $0x50] sm:$0xf]
      %v370 = vld [vmem:[%s1 + $0x54] sm:$0xf]
      %v371 = vld [vmem:[%s1 + $0x58] sm:$0xf]
      %v372 = vld [vmem:[%s1 + $0x5c] sm:$0xf]
      %v373 = vld [vmem:[%s1 + $0x60] sm:$0xf]
      %v374 = vld [vmem:[%s1 + $0x64] sm:$0xf]
      %v375 = vld [vmem:[%s1 + $0x68] sm:$0xf]
      %v376 = vld [vmem:[%s1 + $0x6c] sm:$0xf]
      %v377 = vld [vmem:[%s1 + $0x70] sm:$0xf]
      %v378 = vld [vmem:[%s1 + $0x74] sm:$0xf]
      %v379 = vld [vmem:[%s1 + $0x78] sm:$0xf]
      %v380 = vld [vmem:[%s1 + $0x7c] sm:$0xf]
      %v381 = vld [vmem:[%s1 + $0x80] sm:$0xf]
      %v382 = vld [vmem:[%s1 + $0x84] sm:$0xf]
      %v383 = vld [vmem:[%s1 + $0x88] sm:$0xf]
      %v384 = vld [vmem:[%s1 + $0x8c] sm:$0xf]
      %v385 = vld [vmem:[%s1 + $0x90] sm:$0xf]
      %v386 = vld [vmem:[%s1 + $0x94] sm:$0xf]
      %v387 = vld [vmem:[%s1 + $0x98] sm:$0xf]
      %v388 = vld [vmem:[%s1 + $0x9c] sm:$0xf]
      %v389 = vld [vmem:[%s1 + $0xa0] sm:$0xf]
      %v390 = vld [vmem:[%s1 + $0xa4] sm:$0xf]
      %v391 = vld [vmem:[%s1 + $0xa8] sm:$0xf]
      %v392 = vld [vmem:[%s1 + $0xac] sm:$0xf]
      %v393 = vld [vmem:[%s1 + $0xb0] sm:$0xf]
      %v394 = vld [vmem:[%s1 + $0xb4] sm:$0xf]
      %v395 = vld [vmem:[%s1 + $0xb8] sm:$0xf]
      %v396 = vld [vmem:[%s1 + $0xbc] sm:$0xf]
      %v397 = vld [vmem:[%s1 + $0xc0] sm:$0xf]
      %v398 = vld [vmem:[%s1 + $0xc4] sm:$0xf]
      %v399 = vld [vmem:[%s1 + $0xc8] sm:$0xf]
      %v400 = vld [vmem:[%s1 + $0xcc] sm:$0xf]
      %v401 = vld [vmem:[%s1 + $0xd0] sm:$0xf]
      %v402 = vld [vmem:[%s1 + $0xd4] sm:$0xf]
      %v403 = vld [vmem:[%s1 + $0xd8] sm:$0xf]
      %v404 = vld [vmem:[%s1 + $0xdc] sm:$0xf]
      %v405 = vld [vmem:[%s1 + $0xe0] sm:$0xf]
      %v406 = vld [vmem:[%s1 + $0xe4] sm:$0xf]
      %v407 = vld [vmem:[%s1 + $0xe8] sm:$0xf]
      %v408 = vld [vmem:[%s1 + $0xec] sm:$0xf]
      %v409 = vld [vmem:[%s1 + $0xf0] sm:$0xf]
      %v410 = vld [vmem:[%s1 + $0xf4] sm:$0xf]
      %v411 = vld [vmem:[%s1 + $0xf8] sm:$0xf]
      %v412 = vld [vmem:[%s1 + $0xfc] sm:$0xf]
      %v413 = vld [vmem:[%s1 + $0x100] sm:$0xf]
      %v414 = vld [vmem:[%s1 + $0x104] sm:$0xf]
      %v415 = vld [vmem:[%s1 + $0x108] sm:$0xf]
      %v416 = vld [vmem:[%s1 + $0x10c] sm:$0xf]
      %v417 = vld [vmem:[%s1 + $0x110] sm:$0xf]
      %v418 = vld [vmem:[%s1 + $0x114] sm:$0xf]
      %v419 = vld [vmem:[%s1 + $0x118] sm:$0xf]
      %v420 = vld [vmem:[%s1 + $0x11c] sm:$0xf]
      %v421 = vld [vmem:[%s1 + $0x120] sm:$0xf]
      %v422 = vld [vmem:[%s1 + $0x124] sm:$0xf]
      %v423 = vld [vmem:[%s1 + $0x128] sm:$0xf]
      %v424 = vld [vmem:[%s1 + $0x12c] sm:$0xf]
      %v425 = vld [vmem:[%s1 + $0x130] sm:$0xf]
      %v426 = vld [vmem:[%s1 + $0x134] sm:$0xf]
      %v427 = vld [vmem:[%s1 + $0x138] sm:$0xf]
      %v428 = vld [vmem:[%s1 + $0x13c] sm:$0xf]
      %v429 = vld [vmem:[%s1 + $0x140] sm:$0xf]
      %v430 = vld [vmem:[%s1 + $0x144] sm:$0xf]
      %v431 = vld [vmem:[%s1 + $0x148] sm:$0xf]
      %v432 = vld [vmem:[%s1 + $0x14c] sm:$0xf]
      %v433 = vld [vmem:[%s1 + $0x150] sm:$0xf]
      %v434 = vld [vmem:[%s1 + $0x154] sm:$0xf]
      %v435 = vld [vmem:[%s1 + $0x158] sm:$0xf]
      %v436 = vld [vmem:[%s1 + $0x15c] sm:$0xf]
      %v437 = vld [vmem:[%s1 + $0x160] sm:$0xf]
      %v438 = vld [vmem:[%s1 + $0x164] sm:$0xf]
      %v439 = vld [vmem:[%s1 + $0x168] sm:$0xf]
      %v440 = vld [vmem:[%s1 + $0x16c] sm:$0xf]
      %v441 = vld [vmem:[%s1 + $0x170] sm:$0xf]
      %v442 = vld [vmem:[%s1 + $0x174] sm:$0xf]
      %v443 = vld [vmem:[%s1 + $0x178] sm:$0xf]
      %v444 = vld [vmem:[%s1 + $0x17c] sm:$0xf]
      %v445 = vld [vmem:[%s1 + $0x180] sm:$0xf]
      %v446 = vld [vmem:[%s1 + $0x184] sm:$0xf]
      %v447 = vld [vmem:[%s1 + $0x188] sm:$0xf]
      %v448 = vld [vmem:[%s1 + $0x18c] sm:$0xf]
      %v449 = vld [vmem:[%s1 + $0x190] sm:$0xf]
      %v450 = vld [vmem:[%s1 + $0x194] sm:$0xf]
      %v451 = vld [vmem:[%s1 + $0x198] sm:$0xf]
      %v452 = vld [vmem:[%s1 + $0x19c] sm:$0xf]
      %v453 = vld [vmem:[%s1 + $0x1a0] sm:$0xf]
      %v454 = vld [vmem:[%s1 + $0x1a4] sm:$0xf]
      %v455 = vld [vmem:[%s1 + $0x1a8] sm:$0xf]
      %v456 = vld [vmem:[%s1 + $0x1ac] sm:$0xf]
      %v457 = vld [vmem:[%s1 + $0x1b0] sm:$0xf]
      %v458 = vld [vmem:[%s1 + $0x1b4] sm:$0xf]
      %v459 = vld [vmem:[%s1 + $0x1b8] sm:$0xf]
      %v460 = vld [vmem:[%s1 + $0x1bc] sm:$0xf]
      %v461 = vld [vmem:[%s1 + $0x1c0] sm:$0xf]
      %v462 = vld [vmem:[%s1 + $0x1c4] sm:$0xf]
      %v463 = vld [vmem:[%s1 + $0x1c8] sm:$0xf]
      %v464 = vld [vmem:[%s1 + $0x1cc] sm:$0xf]
      %v465 = vld [vmem:[%s1 + $0x1d0] sm:$0xf]
      %v466 = vld [vmem:[%s1 + $0x1d4] sm:$0xf]
      %v467 = vld [vmem:[%s1 + $0x1d8] sm:$0xf]
      %v468 = vld [vmem:[%s1 + $0x1dc] sm:$0xf]
      %v469 = vld [vmem:[%s1 + $0x1e0] sm:$0xf]
      %v470 = vld [vmem:[%s1 + $0x1e4] sm:$0xf]
      %v471 = vld [vmem:[%s1 + $0x1e8] sm:$0xf]
      %v472 = vld [vmem:[%s1 + $0x1ec] sm:$0xf]
      %v473 = vld [vmem:[%s1 + $0x1f0] sm:$0xf]
      %v474 = vld [vmem:[%s1 + $0x1f4] sm:$0xf]
      %v475 = vld [vmem:[%s1 + $0x1f8] sm:$0xf]
      %v476 = vld [vmem:[%s1 + $0x1fc] sm:$0xf]
      %v477 = vld [vmem:[%s1 + $0x200] sm:$0xf]
      %v478 = vld [vmem:[%s1 + $0x204] sm:$0xf]
      %v479 = vld [vmem:[%s1 + $0x208] sm:$0xf]
      %v480 = vld [vmem:[%s1 + $0x20c] sm:$0xf]
      %v481 = vld [vmem:[%s1 + $0x210] sm:$0xf]
      %v482 = vld [vmem:[%s1 + $0x214] sm:$0xf]
      %v483 = vld [vmem:[%s1 + $0x218] sm:$0xf]
      %v484 = vld [vmem:[%s1 + $0x21c] sm:$0xf]
      %v485 = vld [vmem:[%s1 + $0x220] sm:$0xf]
      %v486 = vld [vmem:[%s1 + $0x224] sm:$0xf]
      %v487 = vld [vmem:[%s1 + $0x228] sm:$0xf]
      %v488 = vld [vmem:[%s1 + $0x22c] sm:$0xf]
      %v489 = vld [vmem:[%s1 + $0x230] sm:$0xf]
      %v490 = vld [vmem:[%s1 + $0x234] sm:$0xf]
      %v491 = vld [vmem:[%s1 + $0x238] sm:$0xf]
      %v492 = vld [vmem:[%s1 + $0x23c] sm:$0xf]
      %v493 = vld [vmem:[%s1 + $0x240] sm:$0xf]
      %v494 = vld [vmem:[%s1 + $0x244] sm:$0xf]
      %v495 = vld [vmem:[%s1 + $0x248] sm:$0xf]
      %v496 = vld [vmem:[%s1 + $0x24c] sm:$0xf]
      %v497 = vld [vmem:[%s1 + $0x250] sm:$0xf]
      %v498 = vld [vmem:[%s1 + $0x254] sm:$0xf]
      %v499 = vld [vmem:[%s1 + $0x258] sm:$0xf]
      %v500 = vld [vmem:[%s1 + $0x25c] sm:$0xf]
      %v501 = vld [vmem:[%s1 + $0x260] sm:$0xf]
      %v502 = vld [vmem:[%s1 + $0x264] sm:$0xf]
      %v503 = vld [vmem:[%s1 + $0x268] sm:$0xf]
      %v504 = vld [vmem:[%s1 + $0x26c] sm:$0xf]
      %v505 = vld [vmem:[%s1 + $0x270] sm:$0xf]
      %v506 = vld [vmem:[%s1 + $0x274] sm:$0xf]
      %v507 = vld [vmem:[%s1 + $0x278] sm:$0xf]
      %v508 = vld [vmem:[%s1 + $0x27c] sm:$0xf]
      %v509 = vld [vmem:[%s1 + $0x280] sm:$0xf]
      %v510 = vld [vmem:[%s1 + $0x284] sm:$0xf]
      %v511 = vld [vmem:[%s1 + $0x288] sm:$0xf]
      %v512 = vld [vmem:[%s1 + $0x28c] sm:$0xf]
      %v513 = vld [vmem:[%s1 + $0x290] sm:$0xf]
      %v514 = vld [vmem:[%s1 + $0x294] sm:$0xf]
      %v515 = vld [vmem:[%s1 + $0x298] sm:$0xf]
      %v516 = vld [vmem:[%s1 + $0x29c] sm:$0xf]
      %v517 = vld [vmem:[%s1 + $0x2a0] sm:$0xf]
      %v518 = vld [vmem:[%s1 + $0x2a4] sm:$0xf]
      %v519 = vld [vmem:[%s1 + $0x2a8] sm:$0xf]
      %v520 = vld [vmem:[%s1 + $0x2ac] sm:$0xf]
      %v521 = vld [vmem:[%s1 + $0x2b0] sm:$0xf]
      %v522 = vld [vmem:[%s1 + $0x2b4] sm:$0xf]
      %v523 = vld [vmem:[%s1 + $0x2b8] sm:$0xf]
      %v524 = vld [vmem:[%s1 + $0x2bc] sm:$0xf]
      %v525 = vld [vmem:[%s161] sm:$0x7]
      %v702 = vunpack.c.l.b16 %v349
      %v703 = vunpack.c.l.b16 %v350
      %v704 = vunpack.c.l.b16 %v351
      %v705 = vunpack.c.l.b16 %v352
      %v706 = vunpack.c.l.b16 %v353
      %v707 = vunpack.c.l.b16 %v354
      %v708 = vunpack.c.l.b16 %v355
      %v709 = vunpack.c.l.b16 %v356
      %v710 = vunpack.c.l.b16 %v357
      %v711 = vunpack.c.l.b16 %v358
      %v712 = vunpack.c.l.b16 %v359
      %v713 = vunpack.c.l.b16 %v360
      %v714 = vunpack.c.l.b16 %v361
      %v715 = vunpack.c.l.b16 %v362
      %v716 = vunpack.c.l.b16 %v363
      %v717 = vunpack.c.l.b16 %v364
      %v718 = vunpack.c.l.b16 %v365
      %v719 = vunpack.c.l.b16 %v366
      %v720 = vunpack.c.l.b16 %v367
      %v721 = vunpack.c.l.b16 %v368
      %v722 = vunpack.c.l.b16 %v369
      %v723 = vunpack.c.l.b16 %v370
      %v724 = vunpack.c.l.b16 %v371
      %v725 = vunpack.c.l.b16 %v372
      %v726 = vunpack.c.l.b16 %v373
      %v727 = vunpack.c.l.b16 %v374
      %v728 = vunpack.c.l.b16 %v375
      %v729 = vunpack.c.l.b16 %v376
      %v730 = vunpack.c.l.b16 %v377
      %v731 = vunpack.c.l.b16 %v378
      %v732 = vunpack.c.l.b16 %v379
      %v733 = vunpack.c.l.b16 %v380
      %v734 = vunpack.c.l.b16 %v381
      %v735 = vunpack.c.l.b16 %v382
      %v736 = vunpack.c.l.b16 %v383
      %v737 = vunpack.c.l.b16 %v384
      %v738 = vunpack.c.l.b16 %v385
      %v739 = vunpack.c.l.b16 %v386
      %v740 = vunpack.c.l.b16 %v387
      %v741 = vunpack.c.l.b16 %v388
      %v742 = vunpack.c.l.b16 %v389
      %v743 = vunpack.c.l.b16 %v390
      %v744 = vunpack.c.l.b16 %v391
      %v745 = vunpack.c.l.b16 %v392
      %v746 = vunpack.c.l.b16 %v393
      %v747 = vunpack.c.l.b16 %v394
      %v748 = vunpack.c.l.b16 %v395
      %v749 = vunpack.c.l.b16 %v396
      %v750 = vunpack.c.l.b16 %v397
      %v751 = vunpack.c.l.b16 %v398
      %v752 = vunpack.c.l.b16 %v399
      %v753 = vunpack.c.l.b16 %v400
      %v754 = vunpack.c.l.b16 %v401
      %v755 = vunpack.c.l.b16 %v402
      %v756 = vunpack.c.l.b16 %v403
      %v757 = vunpack.c.l.b16 %v404
      %v758 = vunpack.c.l.b16 %v405
      %v759 = vunpack.c.l.b16 %v406
      %v760 = vunpack.c.l.b16 %v407
      %v761 = vunpack.c.l.b16 %v408
      %v762 = vunpack.c.l.b16 %v409
      %v763 = vunpack.c.l.b16 %v410
      %v764 = vunpack.c.l.b16 %v411
      %v765 = vunpack.c.l.b16 %v412
      %v766 = vunpack.c.l.b16 %v413
      %v767 = vunpack.c.l.b16 %v414
      %v768 = vunpack.c.l.b16 %v415
      %v769 = vunpack.c.l.b16 %v416
      %v770 = vunpack.c.l.b16 %v417
      %v771 = vunpack.c.l.b16 %v418
      %v772 = vunpack.c.l.b16 %v419
      %v773 = vunpack.c.l.b16 %v420
      %v774 = vunpack.c.l.b16 %v421
      %v775 = vunpack.c.l.b16 %v422
      %v776 = vunpack.c.l.b16 %v423
      %v777 = vunpack.c.l.b16 %v424
      %v778 = vunpack.c.l.b16 %v425
      %v779 = vunpack.c.l.b16 %v426
      %v780 = vunpack.c.l.b16 %v427
      %v781 = vunpack.c.l.b16 %v428
      %v782 = vunpack.c.l.b16 %v429
      %v783 = vunpack.c.l.b16 %v430
      %v784 = vunpack.c.l.b16 %v431
      %v785 = vunpack.c.l.b16 %v432
      %v786 = vunpack.c.l.b16 %v433
      %v787 = vunpack.c.l.b16 %v434
      %v788 = vunpack.c.l.b16 %v435
      %v789 = vunpack.c.l.b16 %v436
      %v790 = vunpack.c.l.b16 %v437
      %v791 = vunpack.c.l.b16 %v438
      %v792 = vunpack.c.l.b16 %v439
      %v793 = vunpack.c.l.b16 %v440
      %v794 = vunpack.c.l.b16 %v441
      %v795 = vunpack.c.l.b16 %v442
      %v796 = vunpack.c.l.b16 %v443
      %v797 = vunpack.c.l.b16 %v444
      %v798 = vunpack.c.l.b16 %v445
      %v799 = vunpack.c.l.b16 %v446
      %v800 = vunpack.c.l.b16 %v447
      %v801 = vunpack.c.l.b16 %v448
      %v802 = vunpack.c.l.b16 %v449
      %v803 = vunpack.c.l.b16 %v450
      %v804 = vunpack.c.l.b16 %v451
      %v805 = vunpack.c.l.b16 %v452
      %v806 = vunpack.c.l.b16 %v453
      %v807 = vunpack.c.l.b16 %v454
      %v808 = vunpack.c.l.b16 %v455
      %v809 = vunpack.c.l.b16 %v456
      %v810 = vunpack.c.l.b16 %v457
      %v811 = vunpack.c.l.b16 %v458
      %v812 = vunpack.c.l.b16 %v459
      %v813 = vunpack.c.l.b16 %v460
      %v814 = vunpack.c.l.b16 %v461
      %v815 = vunpack.c.l.b16 %v462
      %v816 = vunpack.c.l.b16 %v463
      %v817 = vunpack.c.l.b16 %v464
      %v818 = vunpack.c.l.b16 %v465
      %v819 = vunpack.c.l.b16 %v466
      %v820 = vunpack.c.l.b16 %v467
      %v821 = vunpack.c.l.b16 %v468
      %v822 = vunpack.c.l.b16 %v469
      %v823 = vunpack.c.l.b16 %v470
      %v824 = vunpack.c.l.b16 %v471
      %v825 = vunpack.c.l.b16 %v472
      %v826 = vunpack.c.l.b16 %v473
      %v827 = vunpack.c.l.b16 %v474
      %v828 = vunpack.c.l.b16 %v475
      %v829 = vunpack.c.l.b16 %v476
      %v830 = vunpack.c.l.b16 %v477
      %v831 = vunpack.c.l.b16 %v478
      %v832 = vunpack.c.l.b16 %v479
      %v833 = vunpack.c.l.b16 %v480
      %v834 = vunpack.c.l.b16 %v481
      %v835 = vunpack.c.l.b16 %v482
      %v836 = vunpack.c.l.b16 %v483
      %v837 = vunpack.c.l.b16 %v484
      %v838 = vunpack.c.l.b16 %v485
      %v839 = vunpack.c.l.b16 %v486
      %v840 = vunpack.c.l.b16 %v487
      %v841 = vunpack.c.l.b16 %v488
      %v842 = vunpack.c.l.b16 %v489
      %v843 = vunpack.c.l.b16 %v490
      %v844 = vunpack.c.l.b16 %v491
      %v845 = vunpack.c.l.b16 %v492
      %v846 = vunpack.c.l.b16 %v493
      %v847 = vunpack.c.l.b16 %v494
      %v848 = vunpack.c.l.b16 %v495
      %v849 = vunpack.c.l.b16 %v496
      %v850 = vunpack.c.l.b16 %v497
      %v851 = vunpack.c.l.b16 %v498
      %v852 = vunpack.c.l.b16 %v499
      %v853 = vunpack.c.l.b16 %v500
      %v854 = vunpack.c.l.b16 %v501
      %v855 = vunpack.c.l.b16 %v502
      %v856 = vunpack.c.l.b16 %v503
      %v857 = vunpack.c.l.b16 %v504
      %v858 = vunpack.c.l.b16 %v505
      %v859 = vunpack.c.l.b16 %v506
      %v860 = vunpack.c.l.b16 %v507
      %v861 = vunpack.c.l.b16 %v508
      %v862 = vunpack.c.l.b16 %v509
      %v863 = vunpack.c.l.b16 %v510
      %v864 = vunpack.c.l.b16 %v511
      %v865 = vunpack.c.l.b16 %v512
      %v866 = vunpack.c.l.b16 %v513
      %v867 = vunpack.c.l.b16 %v514
      %v868 = vunpack.c.l.b16 %v515
      %v869 = vunpack.c.l.b16 %v516
      %v870 = vunpack.c.l.b16 %v517
      %v871 = vunpack.c.l.b16 %v518
      %v872 = vunpack.c.l.b16 %v519
      %v873 = vunpack.c.l.b16 %v520
      %v874 = vunpack.c.l.b16 %v521
      %v875 = vunpack.c.l.b16 %v522
      %v876 = vunpack.c.l.b16 %v523
      %v877 = vunpack.c.l.b16 %v524
      %v878 = vpack.c.b16 %v703, %v702
      %v879 = vpack.c.b16 %v705, %v704
      %v880 = vpack.c.b16 %v707, %v706
      %v881 = vpack.c.b16 %v709, %v708
      %v882 = vpack.c.b16 %v711, %v710
      %v883 = vpack.c.b16 %v713, %v712
      %v884 = vpack.c.b16 %v715, %v714
      %v885 = vpack.c.b16 %v717, %v716
      %v886 = vpack.c.b16 %v719, %v718
      %v887 = vpack.c.b16 %v721, %v720
      %v888 = vpack.c.b16 %v723, %v722
      %v889 = vpack.c.b16 %v725, %v724
      %v890 = vpack.c.b16 %v727, %v726
      %v891 = vpack.c.b16 %v729, %v728
      %v892 = vpack.c.b16 %v731, %v730
      %v893 = vpack.c.b16 %v733, %v732
      %v894 = vpack.c.b16 %v735, %v734
      %v895 = vpack.c.b16 %v737, %v736
      %v896 = vpack.c.b16 %v739, %v738
      %v897 = vpack.c.b16 %v741, %v740
      %v898 = vpack.c.b16 %v743, %v742
      %v899 = vpack.c.b16 %v745, %v744
      %v900 = vpack.c.b16 %v747, %v746
      %v901 = vpack.c.b16 %v749, %v748
      %v902 = vpack.c.b16 %v751, %v750
      %v903 = vpack.c.b16 %v753, %v752
      %v904 = vpack.c.b16 %v755, %v754
      %v905 = vpack.c.b16 %v757, %v756
      %v906 = vpack.c.b16 %v759, %v758
      %v907 = vpack.c.b16 %v761, %v760
      %v908 = vpack.c.b16 %v763, %v762
      %v909 = vpack.c.b16 %v765, %v764
      %v910 = vpack.c.b16 %v767, %v766
      %v911 = vpack.c.b16 %v769, %v768
      %v912 = vpack.c.b16 %v771, %v770
      %v913 = vpack.c.b16 %v773, %v772
      %v914 = vpack.c.b16 %v775, %v774
      %v915 = vpack.c.b16 %v777, %v776
      %v916 = vpack.c.b16 %v779, %v778
      %v917 = vpack.c.b16 %v781, %v780
      %v918 = vpack.c.b16 %v783, %v782
      %v919 = vpack.c.b16 %v785, %v784
      %v920 = vpack.c.b16 %v787, %v786
      %v921 = vpack.c.b16 %v789, %v788
      %v922 = vpack.c.b16 %v791, %v790
      %v923 = vpack.c.b16 %v793, %v792
      %v924 = vpack.c.b16 %v795, %v794
      %v925 = vpack.c.b16 %v797, %v796
      %v926 = vpack.c.b16 %v799, %v798
      %v927 = vpack.c.b16 %v801, %v800
      %v928 = vpack.c.b16 %v803, %v802
      %v929 = vpack.c.b16 %v805, %v804
      %v930 = vpack.c.b16 %v807, %v806
      %v931 = vpack.c.b16 %v809, %v808
      %v932 = vpack.c.b16 %v811, %v810
      %v933 = vpack.c.b16 %v813, %v812
      %v934 = vpack.c.b16 %v815, %v814
      %v935 = vpack.c.b16 %v817, %v816
      %v936 = vpack.c.b16 %v819, %v818
      %v937 = vpack.c.b16 %v821, %v820
      %v938 = vpack.c.b16 %v823, %v822
      %v939 = vpack.c.b16 %v825, %v824
      %v940 = vpack.c.b16 %v827, %v826
      %v941 = vpack.c.b16 %v829, %v828
      %v942 = vpack.c.b16 %v831, %v830
      %v943 = vpack.c.b16 %v833, %v832
      %v944 = vpack.c.b16 %v835, %v834
      %v945 = vpack.c.b16 %v837, %v836
      %v946 = vpack.c.b16 %v839, %v838
      %v947 = vpack.c.b16 %v841, %v840
      %v948 = vpack.c.b16 %v843, %v842
      %v949 = vpack.c.b16 %v845, %v844
      %v950 = vpack.c.b16 %v847, %v846
      %v951 = vpack.c.b16 %v849, %v848
      %v952 = vpack.c.b16 %v851, %v850
      %v953 = vpack.c.b16 %v853, %v852
      %v954 = vpack.c.b16 %v855, %v854
      %v955 = vpack.c.b16 %v857, %v856
      %v956 = vpack.c.b16 %v859, %v858
      %v957 = vpack.c.b16 %v861, %v860
      %v958 = vpack.c.b16 %v863, %v862
      %v959 = vpack.c.b16 %v865, %v864
      %v960 = vpack.c.b16 %v867, %v866
      %v961 = vpack.c.b16 %v869, %v868
      %v962 = vpack.c.b16 %v871, %v870
      %v963 = vpack.c.b16 %v873, %v872
      %v964 = vpack.c.b16 %v875, %v874
      %v965 = vpack.c.b16 %v877, %v876
      %vm966 = vcmask 39936
      %v968 = vsel %vm966, %v878, 0
      %v971 = vsel %vm966, %v879, 0
      %v974 = vsel %vm966, %v880, 0
      %v977 = vsel %vm966, %v881, 0
      %v980 = vsel %vm966, %v882, 0
      %v983 = vsel %vm966, %v883, 0
      %v986 = vsel %vm966, %v884, 0
      %v989 = vsel %vm966, %v885, 0
      %v992 = vsel %vm966, %v886, 0
      %v995 = vsel %vm966, %v887, 0
      %v998 = vsel %vm966, %v888, 0
      %v1001 = vsel %vm966, %v889, 0
      %v1004 = vsel %vm966, %v890, 0
      %v1007 = vsel %vm966, %v891, 0
      %v1010 = vsel %vm966, %v892, 0
      %v1013 = vsel %vm966, %v893, 0
      %v1016 = vsel %vm966, %v894, 0
      %v1019 = vsel %vm966, %v895, 0
      %v1022 = vsel %vm966, %v896, 0
      %v1025 = vsel %vm966, %v897, 0
      %v1028 = vsel %vm966, %v898, 0
      %v1031 = vsel %vm966, %v899, 0
      %v1034 = vsel %vm966, %v900, 0
      %v1037 = vsel %vm966, %v901, 0
      %v1040 = vsel %vm966, %v902, 0
      %v1043 = vsel %vm966, %v903, 0
      %v1046 = vsel %vm966, %v904, 0
      %v1049 = vsel %vm966, %v905, 0
      %v1052 = vsel %vm966, %v906, 0
      %v1055 = vsel %vm966, %v907, 0
      %v1058 = vsel %vm966, %v908, 0
      %v1061 = vsel %vm966, %v909, 0
      %v1064 = vsel %vm966, %v910, 0
      %v1067 = vsel %vm966, %v911, 0
      %v1070 = vsel %vm966, %v912, 0
      %v1073 = vsel %vm966, %v913, 0
      %v1076 = vsel %vm966, %v914, 0
      %v1079 = vsel %vm966, %v915, 0
      %v1082 = vsel %vm966, %v916, 0
      %v1085 = vsel %vm966, %v917, 0
      %v1088 = vsel %vm966, %v918, 0
      %v1091 = vsel %vm966, %v919, 0
      %v1094 = vsel %vm966, %v920, 0
      %v1097 = vsel %vm966, %v921, 0
      %v1100 = vsel %vm966, %v922, 0
      %v1103 = vsel %vm966, %v923, 0
      %v1106 = vsel %vm966, %v924, 0
      %v1109 = vsel %vm966, %v925, 0
      %v1112 = vsel %vm966, %v926, 0
      %v1115 = vsel %vm966, %v927, 0
      %v1118 = vsel %vm966, %v928, 0
      %v1121 = vsel %vm966, %v929, 0
      %v1124 = vsel %vm966, %v930, 0
      %v1127 = vsel %vm966, %v931, 0
      %v1130 = vsel %vm966, %v932, 0
      %v1133 = vsel %vm966, %v933, 0
      %v1136 = vsel %vm966, %v934, 0
      %v1139 = vsel %vm966, %v935, 0
      %v1142 = vsel %vm966, %v936, 0
      %v1145 = vsel %vm966, %v937, 0
      %v1148 = vsel %vm966, %v938, 0
      %v1151 = vsel %vm966, %v939, 0
      %v1154 = vsel %vm966, %v940, 0
      %v1157 = vsel %vm966, %v941, 0
      %v1160 = vsel %vm966, %v942, 0
      %v1163 = vsel %vm966, %v943, 0
      %v1166 = vsel %vm966, %v944, 0
      %v1169 = vsel %vm966, %v945, 0
      %v1172 = vsel %vm966, %v946, 0
      %v1175 = vsel %vm966, %v947, 0
      %v1178 = vsel %vm966, %v948, 0
      %v1181 = vsel %vm966, %v949, 0
      %v1184 = vsel %vm966, %v950, 0
      %v1187 = vsel %vm966, %v951, 0
      %v1190 = vsel %vm966, %v952, 0
      %v1193 = vsel %vm966, %v953, 0
      %v1196 = vsel %vm966, %v954, 0
      %v1199 = vsel %vm966, %v955, 0
      %v1202 = vsel %vm966, %v956, 0
      %v1205 = vsel %vm966, %v957, 0
      %v1208 = vsel %vm966, %v958, 0
      %v1211 = vsel %vm966, %v959, 0
      %v1214 = vsel %vm966, %v960, 0
      %v1217 = vsel %vm966, %v961, 0
      %v1220 = vsel %vm966, %v962, 0
      %v1223 = vsel %vm966, %v963, 0
      %v1226 = vsel %vm966, %v964, 0
      %v1229 = vsel %vm966, %v965, 0
      %vm1231 = vcmask 1041408
      %vm1232 = vcmask 1042432
      %v1233 = vsel %vm1231, 4294967295, 65535
      %v1234 = vsel %vm1232, %v1233, 0
      %v1236 = vand.u32 %v525, %v1234
      %1238 = vmatpush.bf16.msra.mxu0 0
      %1239 = vmatpush.bf16.msra.mxu0 0
      %1240 = vmatpush.bf16.msra.mxu0 0
      %1241 = vmatpush.bf16.msra.mxu0 0
      %1242 = vmatpush.bf16.msra.mxu0 0
      %1243 = vmatpush.bf16.msra.mxu0 0
      %1244 = vmatpush.bf16.msra.mxu0 0
      %1245 = vmatpush.bf16.msra.mxu0 %v1236
      %1246 = vmatmul.bf16.gmra.mxu0 %v968
      %v1247 = vpop.f32.mrf.mxu0
      %v1248 = vadd.f32 0.0, %v1247
      %v1249 = vpop.f32.mrf.mxu0
      %v1250 = vadd.f32 0.0, %v1249
      %1251 = vmatmul.bf16.gmra.mxu0 %v971
      %v1252 = vpop.f32.mrf.mxu0
      %v1253 = vadd.f32 0.0, %v1252
      %v1254 = vpop.f32.mrf.mxu0
      %v1255 = vadd.f32 0.0, %v1254
      %1256 = vmatmul.bf16.gmra.mxu0 %v974
      %v1257 = vpop.f32.mrf.mxu0
      %v1258 = vadd.f32 0.0, %v1257
      %v1259 = vpop.f32.mrf.mxu0
      %v1260 = vadd.f32 0.0, %v1259
      %1261 = vmatmul.bf16.gmra.mxu0 %v977
      %v1262 = vpop.f32.mrf.mxu0
      %v1263 = vadd.f32 0.0, %v1262
      %v1264 = vpop.f32.mrf.mxu0
      %v1265 = vadd.f32 0.0, %v1264
      %1266 = vmatmul.bf16.gmra.mxu0 %v980
      %v1267 = vpop.f32.mrf.mxu0
      %v1268 = vadd.f32 0.0, %v1267
      %v1269 = vpop.f32.mrf.mxu0
      %v1270 = vadd.f32 0.0, %v1269
      %1271 = vmatmul.bf16.gmra.mxu0 %v983
      %v1272 = vpop.f32.mrf.mxu0
      %v1273 = vadd.f32 0.0, %v1272
      %v1274 = vpop.f32.mrf.mxu0
      %v1275 = vadd.f32 0.0, %v1274
      %1276 = vmatmul.bf16.gmra.mxu0 %v986
      %v1277 = vpop.f32.mrf.mxu0
      %v1278 = vadd.f32 0.0, %v1277
      %v1279 = vpop.f32.mrf.mxu0
      %v1280 = vadd.f32 0.0, %v1279
      %1281 = vmatmul.bf16.gmra.mxu0 %v989
      %v1282 = vpop.f32.mrf.mxu0
      %v1283 = vadd.f32 0.0, %v1282
      %v1284 = vpop.f32.mrf.mxu0
      %v1285 = vadd.f32 0.0, %v1284
      %1286 = vmatmul.bf16.gmra.mxu0 %v992
      %v1287 = vpop.f32.mrf.mxu0
      %v1288 = vadd.f32 0.0, %v1287
      %v1289 = vpop.f32.mrf.mxu0
      %v1290 = vadd.f32 0.0, %v1289
      %1291 = vmatmul.bf16.gmra.mxu0 %v995
      %v1292 = vpop.f32.mrf.mxu0
      %v1293 = vadd.f32 0.0, %v1292
      %v1294 = vpop.f32.mrf.mxu0
      %v1295 = vadd.f32 0.0, %v1294
      %1296 = vmatmul.bf16.gmra.mxu0 %v998
      %v1297 = vpop.f32.mrf.mxu0
      %v1298 = vadd.f32 0.0, %v1297
      %v1299 = vpop.f32.mrf.mxu0
      %v1300 = vadd.f32 0.0, %v1299
      %1301 = vmatmul.bf16.gmra.mxu0 %v1001
      %v1302 = vpop.f32.mrf.mxu0
      %v1303 = vadd.f32 0.0, %v1302
      %v1304 = vpop.f32.mrf.mxu0
      %v1305 = vadd.f32 0.0, %v1304
      %1306 = vmatmul.bf16.gmra.mxu0 %v1004
      %v1307 = vpop.f32.mrf.mxu0
      %v1308 = vadd.f32 0.0, %v1307
      %v1309 = vpop.f32.mrf.mxu0
      %v1310 = vadd.f32 0.0, %v1309
      %1311 = vmatmul.bf16.gmra.mxu0 %v1007
      %v1312 = vpop.f32.mrf.mxu0
      %v1313 = vadd.f32 0.0, %v1312
      %v1314 = vpop.f32.mrf.mxu0
      %v1315 = vadd.f32 0.0, %v1314
      %1316 = vmatmul.bf16.gmra.mxu0 %v1010
      %v1317 = vpop.f32.mrf.mxu0
      %v1318 = vadd.f32 0.0, %v1317
      %v1319 = vpop.f32.mrf.mxu0
      %v1320 = vadd.f32 0.0, %v1319
      %1321 = vmatmul.bf16.gmra.mxu0 %v1013
      %v1322 = vpop.f32.mrf.mxu0
      %v1323 = vadd.f32 0.0, %v1322
      %v1324 = vpop.f32.mrf.mxu0
      %v1325 = vadd.f32 0.0, %v1324
      %1326 = vmatmul.bf16.gmra.mxu0 %v1016
      %v1327 = vpop.f32.mrf.mxu0
      %v1328 = vadd.f32 0.0, %v1327
      %v1329 = vpop.f32.mrf.mxu0
      %v1330 = vadd.f32 0.0, %v1329
      %1331 = vmatmul.bf16.gmra.mxu0 %v1019
      %v1332 = vpop.f32.mrf.mxu0
      %v1333 = vadd.f32 0.0, %v1332
      %v1334 = vpop.f32.mrf.mxu0
      %v1335 = vadd.f32 0.0, %v1334
      %1336 = vmatmul.bf16.gmra.mxu0 %v1022
      %v1337 = vpop.f32.mrf.mxu0
      %v1338 = vadd.f32 0.0, %v1337
      %v1339 = vpop.f32.mrf.mxu0
      %v1340 = vadd.f32 0.0, %v1339
      %1341 = vmatmul.bf16.gmra.mxu0 %v1025
      %v1342 = vpop.f32.mrf.mxu0
      %v1343 = vadd.f32 0.0, %v1342
      %v1344 = vpop.f32.mrf.mxu0
      %v1345 = vadd.f32 0.0, %v1344
      %1346 = vmatmul.bf16.gmra.mxu0 %v1028
      %v1347 = vpop.f32.mrf.mxu0
      %v1348 = vadd.f32 0.0, %v1347
      %v1349 = vpop.f32.mrf.mxu0
      %v1350 = vadd.f32 0.0, %v1349
      %1351 = vmatmul.bf16.gmra.mxu0 %v1031
      %v1352 = vpop.f32.mrf.mxu0
      %v1353 = vadd.f32 0.0, %v1352
      %v1354 = vpop.f32.mrf.mxu0
      %v1355 = vadd.f32 0.0, %v1354
      %1356 = vmatmul.bf16.gmra.mxu0 %v1034
      %v1357 = vpop.f32.mrf.mxu0
      %v1358 = vadd.f32 0.0, %v1357
      %v1359 = vpop.f32.mrf.mxu0
      %v1360 = vadd.f32 0.0, %v1359
      %1361 = vmatmul.bf16.gmra.mxu0 %v1037
      %v1362 = vpop.f32.mrf.mxu0
      %v1363 = vadd.f32 0.0, %v1362
      %v1364 = vpop.f32.mrf.mxu0
      %v1365 = vadd.f32 0.0, %v1364
      %1366 = vmatmul.bf16.gmra.mxu0 %v1040
      %v1367 = vpop.f32.mrf.mxu0
      %v1368 = vadd.f32 0.0, %v1367
      %v1369 = vpop.f32.mrf.mxu0
      %v1370 = vadd.f32 0.0, %v1369
      %1371 = vmatmul.bf16.gmra.mxu0 %v1043
      %v1372 = vpop.f32.mrf.mxu0
      %v1373 = vadd.f32 0.0, %v1372
      %v1374 = vpop.f32.mrf.mxu0
      %v1375 = vadd.f32 0.0, %v1374
      %1376 = vmatmul.bf16.gmra.mxu0 %v1046
      %v1377 = vpop.f32.mrf.mxu0
      %v1378 = vadd.f32 0.0, %v1377
      %v1379 = vpop.f32.mrf.mxu0
      %v1380 = vadd.f32 0.0, %v1379
      %1381 = vmatmul.bf16.gmra.mxu0 %v1049
      %v1382 = vpop.f32.mrf.mxu0
      %v1383 = vadd.f32 0.0, %v1382
      %v1384 = vpop.f32.mrf.mxu0
      %v1385 = vadd.f32 0.0, %v1384
      %1386 = vmatmul.bf16.gmra.mxu0 %v1052
      %v1387 = vpop.f32.mrf.mxu0
      %v1388 = vadd.f32 0.0, %v1387
      %v1389 = vpop.f32.mrf.mxu0
      %v1390 = vadd.f32 0.0, %v1389
      %1391 = vmatmul.bf16.gmra.mxu0 %v1055
      %v1392 = vpop.f32.mrf.mxu0
      %v1393 = vadd.f32 0.0, %v1392
      %v1394 = vpop.f32.mrf.mxu0
      %v1395 = vadd.f32 0.0, %v1394
      %1396 = vmatmul.bf16.gmra.mxu0 %v1058
      %v1397 = vpop.f32.mrf.mxu0
      %v1398 = vadd.f32 0.0, %v1397
      %v1399 = vpop.f32.mrf.mxu0
      %v1400 = vadd.f32 0.0, %v1399
      %1401 = vmatmul.bf16.gmra.mxu0 %v1061
      %v1402 = vpop.f32.mrf.mxu0
      %v1403 = vadd.f32 0.0, %v1402
      %v1404 = vpop.f32.mrf.mxu0
      %v1405 = vadd.f32 0.0, %v1404
      %1406 = vmatmul.bf16.gmra.mxu0 %v1064
      %v1407 = vpop.f32.mrf.mxu0
      %v1408 = vadd.f32 0.0, %v1407
      %v1409 = vpop.f32.mrf.mxu0
      %v1410 = vadd.f32 0.0, %v1409
      %1411 = vmatmul.bf16.gmra.mxu0 %v1067
      %v1412 = vpop.f32.mrf.mxu0
      %v1413 = vadd.f32 0.0, %v1412
      %v1414 = vpop.f32.mrf.mxu0
      %v1415 = vadd.f32 0.0, %v1414
      %1416 = vmatmul.bf16.gmra.mxu0 %v1070
      %v1417 = vpop.f32.mrf.mxu0
      %v1418 = vadd.f32 0.0, %v1417
      %v1419 = vpop.f32.mrf.mxu0
      %v1420 = vadd.f32 0.0, %v1419
      %1421 = vmatmul.bf16.gmra.mxu0 %v1073
      %v1422 = vpop.f32.mrf.mxu0
      %v1423 = vadd.f32 0.0, %v1422
      %v1424 = vpop.f32.mrf.mxu0
      %v1425 = vadd.f32 0.0, %v1424
      %1426 = vmatmul.bf16.gmra.mxu0 %v1076
      %v1427 = vpop.f32.mrf.mxu0
      %v1428 = vadd.f32 0.0, %v1427
      %v1429 = vpop.f32.mrf.mxu0
      %v1430 = vadd.f32 0.0, %v1429
      %1431 = vmatmul.bf16.gmra.mxu0 %v1079
      %v1432 = vpop.f32.mrf.mxu0
      %v1433 = vadd.f32 0.0, %v1432
      %v1434 = vpop.f32.mrf.mxu0
      %v1435 = vadd.f32 0.0, %v1434
      %1436 = vmatmul.bf16.gmra.mxu0 %v1082
      %v1437 = vpop.f32.mrf.mxu0
      %v1438 = vadd.f32 0.0, %v1437
      %v1439 = vpop.f32.mrf.mxu0
      %v1440 = vadd.f32 0.0, %v1439
      %1441 = vmatmul.bf16.gmra.mxu0 %v1085
      %v1442 = vpop.f32.mrf.mxu0
      %v1443 = vadd.f32 0.0, %v1442
      %v1444 = vpop.f32.mrf.mxu0
      %v1445 = vadd.f32 0.0, %v1444
      %1446 = vmatmul.bf16.gmra.mxu0 %v1088
      %v1447 = vpop.f32.mrf.mxu0
      %v1448 = vadd.f32 0.0, %v1447
      %v1449 = vpop.f32.mrf.mxu0
      %v1450 = vadd.f32 0.0, %v1449
      %1451 = vmatmul.bf16.gmra.mxu0 %v1091
      %v1452 = vpop.f32.mrf.mxu0
      %v1453 = vadd.f32 0.0, %v1452
      %v1454 = vpop.f32.mrf.mxu0
      %v1455 = vadd.f32 0.0, %v1454
      %1456 = vmatmul.bf16.gmra.mxu0 %v1094
      %v1457 = vpop.f32.mrf.mxu0
      %v1458 = vadd.f32 0.0, %v1457
      %v1459 = vpop.f32.mrf.mxu0
      %v1460 = vadd.f32 0.0, %v1459
      %1461 = vmatmul.bf16.gmra.mxu0 %v1097
      %v1462 = vpop.f32.mrf.mxu0
      %v1463 = vadd.f32 0.0, %v1462
      %v1464 = vpop.f32.mrf.mxu0
      %v1465 = vadd.f32 0.0, %v1464
      %1466 = vmatmul.bf16.gmra.mxu0 %v1100
      %v1467 = vpop.f32.mrf.mxu0
      %v1468 = vadd.f32 0.0, %v1467
      %v1469 = vpop.f32.mrf.mxu0
      %v1470 = vadd.f32 0.0, %v1469
      %1471 = vmatmul.bf16.gmra.mxu0 %v1103
      %v1472 = vpop.f32.mrf.mxu0
      %v1473 = vadd.f32 0.0, %v1472
      %v1474 = vpop.f32.mrf.mxu0
      %v1475 = vadd.f32 0.0, %v1474
      %1476 = vmatmul.bf16.gmra.mxu0 %v1106
      %v1477 = vpop.f32.mrf.mxu0
      %v1478 = vadd.f32 0.0, %v1477
      %v1479 = vpop.f32.mrf.mxu0
      %v1480 = vadd.f32 0.0, %v1479
      %1481 = vmatmul.bf16.gmra.mxu0 %v1109
      %v1482 = vpop.f32.mrf.mxu0
      %v1483 = vadd.f32 0.0, %v1482
      %v1484 = vpop.f32.mrf.mxu0
      %v1485 = vadd.f32 0.0, %v1484
      %1486 = vmatmul.bf16.gmra.mxu0 %v1112
      %v1487 = vpop.f32.mrf.mxu0
      %v1488 = vadd.f32 0.0, %v1487
      %v1489 = vpop.f32.mrf.mxu0
      %v1490 = vadd.f32 0.0, %v1489
      %1491 = vmatmul.bf16.gmra.mxu0 %v1115
      %v1492 = vpop.f32.mrf.mxu0
      %v1493 = vadd.f32 0.0, %v1492
      %v1494 = vpop.f32.mrf.mxu0
      %v1495 = vadd.f32 0.0, %v1494
      %1496 = vmatmul.bf16.gmra.mxu0 %v1118
      %v1497 = vpop.f32.mrf.mxu0
      %v1498 = vadd.f32 0.0, %v1497
      %v1499 = vpop.f32.mrf.mxu0
      %v1500 = vadd.f32 0.0, %v1499
      %1501 = vmatmul.bf16.gmra.mxu0 %v1121
      %v1502 = vpop.f32.mrf.mxu0
      %v1503 = vadd.f32 0.0, %v1502
      %v1504 = vpop.f32.mrf.mxu0
      %v1505 = vadd.f32 0.0, %v1504
      %1506 = vmatmul.bf16.gmra.mxu0 %v1124
      %v1507 = vpop.f32.mrf.mxu0
      %v1508 = vadd.f32 0.0, %v1507
      %v1509 = vpop.f32.mrf.mxu0
      %v1510 = vadd.f32 0.0, %v1509
      %1511 = vmatmul.bf16.gmra.mxu0 %v1127
      %v1512 = vpop.f32.mrf.mxu0
      %v1513 = vadd.f32 0.0, %v1512
      %v1514 = vpop.f32.mrf.mxu0
      %v1515 = vadd.f32 0.0, %v1514
      %1516 = vmatmul.bf16.gmra.mxu0 %v1130
      %v1517 = vpop.f32.mrf.mxu0
      %v1518 = vadd.f32 0.0, %v1517
      %v1519 = vpop.f32.mrf.mxu0
      %v1520 = vadd.f32 0.0, %v1519
      %1521 = vmatmul.bf16.gmra.mxu0 %v1133
      %v1522 = vpop.f32.mrf.mxu0
      %v1523 = vadd.f32 0.0, %v1522
      %v1524 = vpop.f32.mrf.mxu0
      %v1525 = vadd.f32 0.0, %v1524
      %1526 = vmatmul.bf16.gmra.mxu0 %v1136
      %v1527 = vpop.f32.mrf.mxu0
      %v1528 = vadd.f32 0.0, %v1527
      %v1529 = vpop.f32.mrf.mxu0
      %v1530 = vadd.f32 0.0, %v1529
      %1531 = vmatmul.bf16.gmra.mxu0 %v1139
      %v1532 = vpop.f32.mrf.mxu0
      %v1533 = vadd.f32 0.0, %v1532
      %v1534 = vpop.f32.mrf.mxu0
      %v1535 = vadd.f32 0.0, %v1534
      %1536 = vmatmul.bf16.gmra.mxu0 %v1142
      %v1537 = vpop.f32.mrf.mxu0
      %v1538 = vadd.f32 0.0, %v1537
      %v1539 = vpop.f32.mrf.mxu0
      %v1540 = vadd.f32 0.0, %v1539
      %1541 = vmatmul.bf16.gmra.mxu0 %v1145
      %v1542 = vpop.f32.mrf.mxu0
      %v1543 = vadd.f32 0.0, %v1542
      %v1544 = vpop.f32.mrf.mxu0
      %v1545 = vadd.f32 0.0, %v1544
      %1546 = vmatmul.bf16.gmra.mxu0 %v1148
      %v1547 = vpop.f32.mrf.mxu0
      %v1548 = vadd.f32 0.0, %v1547
      %v1549 = vpop.f32.mrf.mxu0
      %v1550 = vadd.f32 0.0, %v1549
      %1551 = vmatmul.bf16.gmra.mxu0 %v1151
      %v1552 = vpop.f32.mrf.mxu0
      %v1553 = vadd.f32 0.0, %v1552
      %v1554 = vpop.f32.mrf.mxu0
      %v1555 = vadd.f32 0.0, %v1554
      %1556 = vmatmul.bf16.gmra.mxu0 %v1154
      %v1557 = vpop.f32.mrf.mxu0
      %v1558 = vadd.f32 0.0, %v1557
      %v1559 = vpop.f32.mrf.mxu0
      %v1560 = vadd.f32 0.0, %v1559
      %1561 = vmatmul.bf16.gmra.mxu0 %v1157
      %v1562 = vpop.f32.mrf.mxu0
      %v1563 = vadd.f32 0.0, %v1562
      %v1564 = vpop.f32.mrf.mxu0
      %v1565 = vadd.f32 0.0, %v1564
      %1566 = vmatmul.bf16.gmra.mxu0 %v1160
      %v1567 = vpop.f32.mrf.mxu0
      %v1568 = vadd.f32 0.0, %v1567
      %v1569 = vpop.f32.mrf.mxu0
      %v1570 = vadd.f32 0.0, %v1569
      %1571 = vmatmul.bf16.gmra.mxu0 %v1163
      %v1572 = vpop.f32.mrf.mxu0
      %v1573 = vadd.f32 0.0, %v1572
      %v1574 = vpop.f32.mrf.mxu0
      %v1575 = vadd.f32 0.0, %v1574
      %1576 = vmatmul.bf16.gmra.mxu0 %v1166
      %v1577 = vpop.f32.mrf.mxu0
      %v1578 = vadd.f32 0.0, %v1577
      %v1579 = vpop.f32.mrf.mxu0
      %v1580 = vadd.f32 0.0, %v1579
      %1581 = vmatmul.bf16.gmra.mxu0 %v1169
      %v1582 = vpop.f32.mrf.mxu0
      %v1583 = vadd.f32 0.0, %v1582
      %v1584 = vpop.f32.mrf.mxu0
      %v1585 = vadd.f32 0.0, %v1584
      %1586 = vmatmul.bf16.gmra.mxu0 %v1172
      %v1587 = vpop.f32.mrf.mxu0
      %v1588 = vadd.f32 0.0, %v1587
      %v1589 = vpop.f32.mrf.mxu0
      %v1590 = vadd.f32 0.0, %v1589
      %1591 = vmatmul.bf16.gmra.mxu0 %v1175
      %v1592 = vpop.f32.mrf.mxu0
      %v1593 = vadd.f32 0.0, %v1592
      %v1594 = vpop.f32.mrf.mxu0
      %v1595 = vadd.f32 0.0, %v1594
      %1596 = vmatmul.bf16.gmra.mxu0 %v1178
      %v1597 = vpop.f32.mrf.mxu0
      %v1598 = vadd.f32 0.0, %v1597
      %v1599 = vpop.f32.mrf.mxu0
      %v1600 = vadd.f32 0.0, %v1599
      %1601 = vmatmul.bf16.gmra.mxu0 %v1181
      %v1602 = vpop.f32.mrf.mxu0
      %v1603 = vadd.f32 0.0, %v1602
      %v1604 = vpop.f32.mrf.mxu0
      %v1605 = vadd.f32 0.0, %v1604
      %1606 = vmatmul.bf16.gmra.mxu0 %v1184
      %v1607 = vpop.f32.mrf.mxu0
      %v1608 = vadd.f32 0.0, %v1607
      %v1609 = vpop.f32.mrf.mxu0
      %v1610 = vadd.f32 0.0, %v1609
      %1611 = vmatmul.bf16.gmra.mxu0 %v1187
      %v1612 = vpop.f32.mrf.mxu0
      %v1613 = vadd.f32 0.0, %v1612
      %v1614 = vpop.f32.mrf.mxu0
      %v1615 = vadd.f32 0.0, %v1614
      %1616 = vmatmul.bf16.gmra.mxu0 %v1190
      %v1617 = vpop.f32.mrf.mxu0
      %v1618 = vadd.f32 0.0, %v1617
      %v1619 = vpop.f32.mrf.mxu0
      %v1620 = vadd.f32 0.0, %v1619
      %1621 = vmatmul.bf16.gmra.mxu0 %v1193
      %v1622 = vpop.f32.mrf.mxu0
      %v1623 = vadd.f32 0.0, %v1622
      %v1624 = vpop.f32.mrf.mxu0
      %v1625 = vadd.f32 0.0, %v1624
      %1626 = vmatmul.bf16.gmra.mxu0 %v1196
      %v1627 = vpop.f32.mrf.mxu0
      %v1628 = vadd.f32 0.0, %v1627
      %v1629 = vpop.f32.mrf.mxu0
      %v1630 = vadd.f32 0.0, %v1629
      %1631 = vmatmul.bf16.gmra.mxu0 %v1199
      %v1632 = vpop.f32.mrf.mxu0
      %v1633 = vadd.f32 0.0, %v1632
      %v1634 = vpop.f32.mrf.mxu0
      %v1635 = vadd.f32 0.0, %v1634
      %1636 = vmatmul.bf16.gmra.mxu0 %v1202
      %v1637 = vpop.f32.mrf.mxu0
      %v1638 = vadd.f32 0.0, %v1637
      %v1639 = vpop.f32.mrf.mxu0
      %v1640 = vadd.f32 0.0, %v1639
      %1641 = vmatmul.bf16.gmra.mxu0 %v1205
      %v1642 = vpop.f32.mrf.mxu0
      %v1643 = vadd.f32 0.0, %v1642
      %v1644 = vpop.f32.mrf.mxu0
      %v1645 = vadd.f32 0.0, %v1644
      %1646 = vmatmul.bf16.gmra.mxu0 %v1208
      %v1647 = vpop.f32.mrf.mxu0
      %v1648 = vadd.f32 0.0, %v1647
      %v1649 = vpop.f32.mrf.mxu0
      %v1650 = vadd.f32 0.0, %v1649
      %1651 = vmatmul.bf16.gmra.mxu0 %v1211
      %v1652 = vpop.f32.mrf.mxu0
      %v1653 = vadd.f32 0.0, %v1652
      %v1654 = vpop.f32.mrf.mxu0
      %v1655 = vadd.f32 0.0, %v1654
      %1656 = vmatmul.bf16.gmra.mxu0 %v1214
      %v1657 = vpop.f32.mrf.mxu0
      %v1658 = vadd.f32 0.0, %v1657
      %v1659 = vpop.f32.mrf.mxu0
      %v1660 = vadd.f32 0.0, %v1659
      %1661 = vmatmul.bf16.gmra.mxu0 %v1217
      %v1662 = vpop.f32.mrf.mxu0
      %v1663 = vadd.f32 0.0, %v1662
      %v1664 = vpop.f32.mrf.mxu0
      %v1665 = vadd.f32 0.0, %v1664
      %1666 = vmatmul.bf16.gmra.mxu0 %v1220
      %v1667 = vpop.f32.mrf.mxu0
      %v1668 = vadd.f32 0.0, %v1667
      %v1669 = vpop.f32.mrf.mxu0
      %v1670 = vadd.f32 0.0, %v1669
      %1671 = vmatmul.bf16.gmra.mxu0 %v1223
      %v1672 = vpop.f32.mrf.mxu0
      %v1673 = vadd.f32 0.0, %v1672
      %v1674 = vpop.f32.mrf.mxu0
      %v1675 = vadd.f32 0.0, %v1674
      %1676 = vmatmul.bf16.gmra.mxu0 %v1226
      %v1677 = vpop.f32.mrf.mxu0
      %v1678 = vadd.f32 0.0, %v1677
      %v1679 = vpop.f32.mrf.mxu0
      %v1680 = vadd.f32 0.0, %v1679
      %1681 = vmatmul.bf16.gmra.mxu0 %v1229
      %v1682 = vpop.f32.mrf.mxu0
      %v1683 = vadd.f32 0.0, %v1682
      %v1684 = vpop.f32.mrf.mxu0
      %v1685 = vadd.f32 0.0, %v1684
      %1686 = vdwg.mxu0
      %v1687 = vmax.f32 %v1248, 0.0
      %v1688 = vmax.f32 %v1250, 0.0
      %v1689 = vmax.f32 %v1253, 0.0
      %v1690 = vmax.f32 %v1255, 0.0
      %v1691 = vmax.f32 %v1258, 0.0
      %v1692 = vmax.f32 %v1260, 0.0
      %v1693 = vmax.f32 %v1263, 0.0
      %v1694 = vmax.f32 %v1265, 0.0
      %v1695 = vmax.f32 %v1268, 0.0
      %v1696 = vmax.f32 %v1270, 0.0
      %v1697 = vmax.f32 %v1273, 0.0
      %v1698 = vmax.f32 %v1275, 0.0
      %v1699 = vmax.f32 %v1278, 0.0
      %v1700 = vmax.f32 %v1280, 0.0
      %v1701 = vmax.f32 %v1283, 0.0
      %v1702 = vmax.f32 %v1285, 0.0
      %v1703 = vmax.f32 %v1288, 0.0
      %v1704 = vmax.f32 %v1290, 0.0
      %v1705 = vmax.f32 %v1293, 0.0
      %v1706 = vmax.f32 %v1295, 0.0
      %v1707 = vmax.f32 %v1298, 0.0
      %v1708 = vmax.f32 %v1300, 0.0
      %v1709 = vmax.f32 %v1303, 0.0
      %v1710 = vmax.f32 %v1305, 0.0
      %v1711 = vmax.f32 %v1308, 0.0
      %v1712 = vmax.f32 %v1310, 0.0
      %v1713 = vmax.f32 %v1313, 0.0
      %v1714 = vmax.f32 %v1315, 0.0
      %v1715 = vmax.f32 %v1318, 0.0
      %v1716 = vmax.f32 %v1320, 0.0
      %v1717 = vmax.f32 %v1323, 0.0
      %v1718 = vmax.f32 %v1325, 0.0
      %v1719 = vmax.f32 %v1328, 0.0
      %v1720 = vmax.f32 %v1330, 0.0
      %v1721 = vmax.f32 %v1333, 0.0
      %v1722 = vmax.f32 %v1335, 0.0
      %v1723 = vmax.f32 %v1338, 0.0
      %v1724 = vmax.f32 %v1340, 0.0
      %v1725 = vmax.f32 %v1343, 0.0
      %v1726 = vmax.f32 %v1345, 0.0
      %v1727 = vmax.f32 %v1348, 0.0
      %v1728 = vmax.f32 %v1350, 0.0
      %v1729 = vmax.f32 %v1353, 0.0
      %v1730 = vmax.f32 %v1355, 0.0
      %v1731 = vmax.f32 %v1358, 0.0
      %v1732 = vmax.f32 %v1360, 0.0
      %v1733 = vmax.f32 %v1363, 0.0
      %v1734 = vmax.f32 %v1365, 0.0
      %v1735 = vmax.f32 %v1368, 0.0
      %v1736 = vmax.f32 %v1370, 0.0
      %v1737 = vmax.f32 %v1373, 0.0
      %v1738 = vmax.f32 %v1375, 0.0
      %v1739 = vmax.f32 %v1378, 0.0
      %v1740 = vmax.f32 %v1380, 0.0
      %v1741 = vmax.f32 %v1383, 0.0
      %v1742 = vmax.f32 %v1385, 0.0
      %v1743 = vmax.f32 %v1388, 0.0
      %v1744 = vmax.f32 %v1390, 0.0
      %v1745 = vmax.f32 %v1393, 0.0
      %v1746 = vmax.f32 %v1395, 0.0
      %v1747 = vmax.f32 %v1398, 0.0
      %v1748 = vmax.f32 %v1400, 0.0
      %v1749 = vmax.f32 %v1403, 0.0
      %v1750 = vmax.f32 %v1405, 0.0
      %v1751 = vmax.f32 %v1408, 0.0
      %v1752 = vmax.f32 %v1410, 0.0
      %v1753 = vmax.f32 %v1413, 0.0
      %v1754 = vmax.f32 %v1415, 0.0
      %v1755 = vmax.f32 %v1418, 0.0
      %v1756 = vmax.f32 %v1420, 0.0
      %v1757 = vmax.f32 %v1423, 0.0
      %v1758 = vmax.f32 %v1425, 0.0
      %v1759 = vmax.f32 %v1428, 0.0
      %v1760 = vmax.f32 %v1430, 0.0
      %v1761 = vmax.f32 %v1433, 0.0
      %v1762 = vmax.f32 %v1435, 0.0
      %v1763 = vmax.f32 %v1438, 0.0
      %v1764 = vmax.f32 %v1440, 0.0
      %v1765 = vmax.f32 %v1443, 0.0
      %v1766 = vmax.f32 %v1445, 0.0
      %v1767 = vmax.f32 %v1448, 0.0
      %v1768 = vmax.f32 %v1450, 0.0
      %v1769 = vmax.f32 %v1453, 0.0
      %v1770 = vmax.f32 %v1455, 0.0
      %v1771 = vmax.f32 %v1458, 0.0
      %v1772 = vmax.f32 %v1460, 0.0
      %v1773 = vmax.f32 %v1463, 0.0
      %v1774 = vmax.f32 %v1465, 0.0
      %v1775 = vmax.f32 %v1468, 0.0
      %v1776 = vmax.f32 %v1470, 0.0
      %v1777 = vmax.f32 %v1473, 0.0
      %v1778 = vmax.f32 %v1475, 0.0
      %v1779 = vmax.f32 %v1478, 0.0
      %v1780 = vmax.f32 %v1480, 0.0
      %v1781 = vmax.f32 %v1483, 0.0
      %v1782 = vmax.f32 %v1485, 0.0
      %v1783 = vmax.f32 %v1488, 0.0
      %v1784 = vmax.f32 %v1490, 0.0
      %v1785 = vmax.f32 %v1493, 0.0
      %v1786 = vmax.f32 %v1495, 0.0
      %v1787 = vmax.f32 %v1498, 0.0
      %v1788 = vmax.f32 %v1500, 0.0
      %v1789 = vmax.f32 %v1503, 0.0
      %v1790 = vmax.f32 %v1505, 0.0
      %v1791 = vmax.f32 %v1508, 0.0
      %v1792 = vmax.f32 %v1510, 0.0
      %v1793 = vmax.f32 %v1513, 0.0
      %v1794 = vmax.f32 %v1515, 0.0
      %v1795 = vmax.f32 %v1518, 0.0
      %v1796 = vmax.f32 %v1520, 0.0
      %v1797 = vmax.f32 %v1523, 0.0
      %v1798 = vmax.f32 %v1525, 0.0
      %v1799 = vmax.f32 %v1528, 0.0
      %v1800 = vmax.f32 %v1530, 0.0
      %v1801 = vmax.f32 %v1533, 0.0
      %v1802 = vmax.f32 %v1535, 0.0
      %v1803 = vmax.f32 %v1538, 0.0
      %v1804 = vmax.f32 %v1540, 0.0
      %v1805 = vmax.f32 %v1543, 0.0
      %v1806 = vmax.f32 %v1545, 0.0
      %v1807 = vmax.f32 %v1548, 0.0
      %v1808 = vmax.f32 %v1550, 0.0
      %v1809 = vmax.f32 %v1553, 0.0
      %v1810 = vmax.f32 %v1555, 0.0
      %v1811 = vmax.f32 %v1558, 0.0
      %v1812 = vmax.f32 %v1560, 0.0
      %v1813 = vmax.f32 %v1563, 0.0
      %v1814 = vmax.f32 %v1565, 0.0
      %v1815 = vmax.f32 %v1568, 0.0
      %v1816 = vmax.f32 %v1570, 0.0
      %v1817 = vmax.f32 %v1573, 0.0
      %v1818 = vmax.f32 %v1575, 0.0
      %v1819 = vmax.f32 %v1578, 0.0
      %v1820 = vmax.f32 %v1580, 0.0
      %v1821 = vmax.f32 %v1583, 0.0
      %v1822 = vmax.f32 %v1585, 0.0
      %v1823 = vmax.f32 %v1588, 0.0
      %v1824 = vmax.f32 %v1590, 0.0
      %v1825 = vmax.f32 %v1593, 0.0
      %v1826 = vmax.f32 %v1595, 0.0
      %v1827 = vmax.f32 %v1598, 0.0
      %v1828 = vmax.f32 %v1600, 0.0
      %v1829 = vmax.f32 %v1603, 0.0
      %v1830 = vmax.f32 %v1605, 0.0
      %v1831 = vmax.f32 %v1608, 0.0
      %v1832 = vmax.f32 %v1610, 0.0
      %v1833 = vmax.f32 %v1613, 0.0
      %v1834 = vmax.f32 %v1615, 0.0
      %v1835 = vmax.f32 %v1618, 0.0
      %v1836 = vmax.f32 %v1620, 0.0
      %v1837 = vmax.f32 %v1623, 0.0
      %v1838 = vmax.f32 %v1625, 0.0
      %v1839 = vmax.f32 %v1628, 0.0
      %v1840 = vmax.f32 %v1630, 0.0
      %v1841 = vmax.f32 %v1633, 0.0
      %v1842 = vmax.f32 %v1635, 0.0
      %v1843 = vmax.f32 %v1638, 0.0
      %v1844 = vmax.f32 %v1640, 0.0
      %v1845 = vmax.f32 %v1643, 0.0
      %v1846 = vmax.f32 %v1645, 0.0
      %v1847 = vmax.f32 %v1648, 0.0
      %v1848 = vmax.f32 %v1650, 0.0
      %v1849 = vmax.f32 %v1653, 0.0
      %v1850 = vmax.f32 %v1655, 0.0
      %v1851 = vmax.f32 %v1658, 0.0
      %v1852 = vmax.f32 %v1660, 0.0
      %v1853 = vmax.f32 %v1663, 0.0
      %v1854 = vmax.f32 %v1665, 0.0
      %v1855 = vmax.f32 %v1668, 0.0
      %v1856 = vmax.f32 %v1670, 0.0
      %v1857 = vmax.f32 %v1673, 0.0
      %v1858 = vmax.f32 %v1675, 0.0
      %v1859 = vmax.f32 %v1678, 0.0
      %v1860 = vmax.f32 %v1680, 0.0
      %v1861 = vmax.f32 %v1683, 0.0
      %v1862 = vmax.f32 %v1685, 0.0
      %v1863 = vld [vmem:[%s166] sm:$0xff]
      %v1864 = vld [vmem:[%s166 + $0x8] sm:$0xff]
      %v1865 = vld [vmem:[%s166 + $0x10] sm:$0xff]
      %v1866 = vld [vmem:[%s166 + $0x18] sm:$0xff]
      %v1867 = vld [vmem:[%s166 + $0x20] sm:$0xff]
      %v1868 = vld [vmem:[%s166 + $0x28] sm:$0xff]
      %v1869 = vld [vmem:[%s166 + $0x30] sm:$0xff]
      %v1870 = vld [vmem:[%s166 + $0x38] sm:$0xff]
      %v1871 = vld [vmem:[%s166 + $0x40] sm:$0xff]
      %v1872 = vld [vmem:[%s166 + $0x48] sm:$0xff]
      %v1873 = vld [vmem:[%s166 + $0x50] sm:$0xff]
      %v1874 = vld [vmem:[%s166 + $0x58] sm:$0xff]
      %v1875 = vld [vmem:[%s166 + $0x60] sm:$0xff]
      %v1876 = vld [vmem:[%s166 + $0x68] sm:$0xff]
      %v1877 = vld [vmem:[%s166 + $0x70] sm:$0xff]
      %v1878 = vld [vmem:[%s166 + $0x78] sm:$0xff]
      %v1879 = vld [vmem:[%s166 + $0x80] sm:$0xff]
      %v1880 = vld [vmem:[%s166 + $0x88] sm:$0xff]
      %v1881 = vld [vmem:[%s166 + $0x90] sm:$0xff]
      %v1882 = vld [vmem:[%s166 + $0x98] sm:$0xff]
      %v1883 = vld [vmem:[%s166 + $0xa0] sm:$0xff]
      %v1884 = vld [vmem:[%s166 + $0xa8] sm:$0xff]
      %v1885 = vld [vmem:[%s166 + $0xb0] sm:$0xff]
      %v1886 = vld [vmem:[%s166 + $0xb8] sm:$0xff]
      %v1887 = vld [vmem:[%s166 + $0xc0] sm:$0xff]
      %v1888 = vld [vmem:[%s166 + $0xc8] sm:$0xff]
      %v1889 = vld [vmem:[%s166 + $0xd0] sm:$0xff]
      %v1890 = vld [vmem:[%s166 + $0xd8] sm:$0xff]
      %v1891 = vld [vmem:[%s166 + $0xe0] sm:$0xff]
      %v1892 = vld [vmem:[%s166 + $0xe8] sm:$0xff]
      %v1893 = vld [vmem:[%s166 + $0xf0] sm:$0xff]
      %v1894 = vld [vmem:[%s166 + $0xf8] sm:$0xff]
      %v1895 = vld [vmem:[%s166 + $0x100] sm:$0xff]
      %v1896 = vld [vmem:[%s166 + $0x108] sm:$0xff]
      %v1897 = vld [vmem:[%s166 + $0x110] sm:$0xff]
      %v1898 = vld [vmem:[%s166 + $0x118] sm:$0xff]
      %v1899 = vld [vmem:[%s166 + $0x120] sm:$0xff]
      %v1900 = vld [vmem:[%s166 + $0x128] sm:$0xff]
      %v1901 = vld [vmem:[%s166 + $0x130] sm:$0xff]
      %v1902 = vld [vmem:[%s166 + $0x138] sm:$0xff]
      %v1903 = vld [vmem:[%s166 + $0x140] sm:$0xff]
      %v1904 = vld [vmem:[%s166 + $0x148] sm:$0xff]
      %v1905 = vld [vmem:[%s166 + $0x150] sm:$0xff]
      %v1906 = vld [vmem:[%s166 + $0x158] sm:$0xff]
      %v1907 = vld [vmem:[%s166 + $0x160] sm:$0xff]
      %v1908 = vld [vmem:[%s166 + $0x168] sm:$0xff]
      %v1909 = vld [vmem:[%s166 + $0x170] sm:$0xff]
      %v1910 = vld [vmem:[%s166 + $0x178] sm:$0xff]
      %v1911 = vld [vmem:[%s166 + $0x180] sm:$0xff]
      %v1912 = vld [vmem:[%s166 + $0x188] sm:$0xff]
      %v1913 = vld [vmem:[%s166 + $0x190] sm:$0xff]
      %v1914 = vld [vmem:[%s166 + $0x198] sm:$0xff]
      %v1915 = vld [vmem:[%s166 + $0x1a0] sm:$0xff]
      %v1916 = vld [vmem:[%s166 + $0x1a8] sm:$0xff]
      %v1917 = vld [vmem:[%s166 + $0x1b0] sm:$0xff]
      %v1918 = vld [vmem:[%s166 + $0x1b8] sm:$0xff]
      %v1919 = vld [vmem:[%s166 + $0x1c0] sm:$0xff]
      %v1920 = vld [vmem:[%s166 + $0x1c8] sm:$0xff]
      %v1921 = vld [vmem:[%s166 + $0x1d0] sm:$0xff]
      %v1922 = vld [vmem:[%s166 + $0x1d8] sm:$0xff]
      %v1923 = vld [vmem:[%s166 + $0x1e0] sm:$0xff]
      %v1924 = vld [vmem:[%s166 + $0x1e8] sm:$0xff]
      %v1925 = vld [vmem:[%s166 + $0x1f0] sm:$0xff]
      %v1926 = vld [vmem:[%s166 + $0x1f8] sm:$0xff]
      %v1927 = vld [vmem:[%s166 + $0x200] sm:$0xff]
      %v1928 = vld [vmem:[%s166 + $0x208] sm:$0xff]
      %v1929 = vld [vmem:[%s166 + $0x210] sm:$0xff]
      %v1930 = vld [vmem:[%s166 + $0x218] sm:$0xff]
      %v1931 = vld [vmem:[%s166 + $0x220] sm:$0xff]
      %v1932 = vld [vmem:[%s166 + $0x228] sm:$0xff]
      %v1933 = vld [vmem:[%s166 + $0x230] sm:$0xff]
      %v1934 = vld [vmem:[%s166 + $0x238] sm:$0xff]
      %v1935 = vld [vmem:[%s166 + $0x240] sm:$0xff]
      %v1936 = vld [vmem:[%s166 + $0x248] sm:$0xff]
      %v1937 = vld [vmem:[%s166 + $0x250] sm:$0xff]
      %v1938 = vld [vmem:[%s166 + $0x258] sm:$0xff]
      %v1939 = vld [vmem:[%s166 + $0x260] sm:$0xff]
      %v1940 = vld [vmem:[%s166 + $0x268] sm:$0xff]
      %v1941 = vld [vmem:[%s166 + $0x270] sm:$0xff]
      %v1942 = vld [vmem:[%s166 + $0x278] sm:$0xff]
      %v1943 = vld [vmem:[%s166 + $0x280] sm:$0xff]
      %v1944 = vld [vmem:[%s166 + $0x288] sm:$0xff]
      %v1945 = vld [vmem:[%s166 + $0x290] sm:$0xff]
      %v1946 = vld [vmem:[%s166 + $0x298] sm:$0xff]
      %v1947 = vld [vmem:[%s166 + $0x2a0] sm:$0xff]
      %v1948 = vld [vmem:[%s166 + $0x2a8] sm:$0xff]
      %v1949 = vld [vmem:[%s166 + $0x2b0] sm:$0xff]
      %v1950 = vld [vmem:[%s166 + $0x2b8] sm:$0xff]
      %v1951 = vld [vmem:[%s166 + $0x2c0] sm:$0xff]
      %v1952 = vld [vmem:[%s166 + $0x2c8] sm:$0xff]
      %v1953 = vld [vmem:[%s166 + $0x2d0] sm:$0xff]
      %v1954 = vld [vmem:[%s166 + $0x2d8] sm:$0xff]
      %v1955 = vld [vmem:[%s166 + $0x2e0] sm:$0xff]
      %v1956 = vld [vmem:[%s166 + $0x2e8] sm:$0xff]
      %v1957 = vld [vmem:[%s166 + $0x2f0] sm:$0xff]
      %v1958 = vld [vmem:[%s166 + $0x2f8] sm:$0xff]
      %v1959 = vld [vmem:[%s166 + $0x300] sm:$0xff]
      %v1960 = vld [vmem:[%s166 + $0x308] sm:$0xff]
      %v1961 = vld [vmem:[%s166 + $0x310] sm:$0xff]
      %v1962 = vld [vmem:[%s166 + $0x318] sm:$0xff]
      %v1963 = vld [vmem:[%s166 + $0x320] sm:$0xff]
      %v1964 = vld [vmem:[%s166 + $0x328] sm:$0xff]
      %v1965 = vld [vmem:[%s166 + $0x330] sm:$0xff]
      %v1966 = vld [vmem:[%s166 + $0x338] sm:$0xff]
      %v1967 = vld [vmem:[%s166 + $0x340] sm:$0xff]
      %v1968 = vld [vmem:[%s166 + $0x348] sm:$0xff]
      %v1969 = vld [vmem:[%s166 + $0x350] sm:$0xff]
      %v1970 = vld [vmem:[%s166 + $0x358] sm:$0xff]
      %v1971 = vld [vmem:[%s166 + $0x360] sm:$0xff]
      %v1972 = vld [vmem:[%s166 + $0x368] sm:$0xff]
      %v1973 = vld [vmem:[%s166 + $0x370] sm:$0xff]
      %v1974 = vld [vmem:[%s166 + $0x378] sm:$0xff]
      %v1975 = vld [vmem:[%s166 + $0x380] sm:$0xff]
      %v1976 = vld [vmem:[%s166 + $0x388] sm:$0xff]
      %v1977 = vld [vmem:[%s166 + $0x390] sm:$0xff]
      %v1978 = vld [vmem:[%s166 + $0x398] sm:$0xff]
      %v1979 = vld [vmem:[%s166 + $0x3a0] sm:$0xff]
      %v1980 = vld [vmem:[%s166 + $0x3a8] sm:$0xff]
      %v1981 = vld [vmem:[%s166 + $0x3b0] sm:$0xff]
      %v1982 = vld [vmem:[%s166 + $0x3b8] sm:$0xff]
      %v1983 = vld [vmem:[%s166 + $0x3c0] sm:$0xff]
      %v1984 = vld [vmem:[%s166 + $0x3c8] sm:$0xff]
      %v1985 = vld [vmem:[%s166 + $0x3d0] sm:$0xff]
      %v1986 = vld [vmem:[%s166 + $0x3d8] sm:$0xff]
      %v1987 = vld [vmem:[%s166 + $0x3e0] sm:$0xff]
      %v1988 = vld [vmem:[%s166 + $0x3e8] sm:$0xff]
      %v1989 = vld [vmem:[%s166 + $0x3f0] sm:$0xff]
      %v1990 = vld [vmem:[%s166 + $0x3f8] sm:$0xff]
      %v1991 = vld [vmem:[%s166 + $0x400] sm:$0xff]
      %v1992 = vld [vmem:[%s166 + $0x408] sm:$0xff]
      %v1993 = vld [vmem:[%s166 + $0x410] sm:$0xff]
      %v1994 = vld [vmem:[%s166 + $0x418] sm:$0xff]
      %v1995 = vld [vmem:[%s166 + $0x420] sm:$0xff]
      %v1996 = vld [vmem:[%s166 + $0x428] sm:$0xff]
      %v1997 = vld [vmem:[%s166 + $0x430] sm:$0xff]
      %v1998 = vld [vmem:[%s166 + $0x438] sm:$0xff]
      %v1999 = vld [vmem:[%s166 + $0x440] sm:$0xff]
      %v2000 = vld [vmem:[%s166 + $0x448] sm:$0xff]
      %v2001 = vld [vmem:[%s166 + $0x450] sm:$0xff]
      %v2002 = vld [vmem:[%s166 + $0x458] sm:$0xff]
      %v2003 = vld [vmem:[%s166 + $0x460] sm:$0xff]
      %v2004 = vld [vmem:[%s166 + $0x468] sm:$0xff]
      %v2005 = vld [vmem:[%s166 + $0x470] sm:$0xff]
      %v2006 = vld [vmem:[%s166 + $0x478] sm:$0xff]
      %v2007 = vld [vmem:[%s166 + $0x480] sm:$0xff]
      %v2008 = vld [vmem:[%s166 + $0x488] sm:$0xff]
      %v2009 = vld [vmem:[%s166 + $0x490] sm:$0xff]
      %v2010 = vld [vmem:[%s166 + $0x498] sm:$0xff]
      %v2011 = vld [vmem:[%s166 + $0x4a0] sm:$0xff]
      %v2012 = vld [vmem:[%s166 + $0x4a8] sm:$0xff]
      %v2013 = vld [vmem:[%s166 + $0x4b0] sm:$0xff]
      %v2014 = vld [vmem:[%s166 + $0x4b8] sm:$0xff]
      %v2015 = vld [vmem:[%s166 + $0x4c0] sm:$0xff]
      %v2016 = vld [vmem:[%s166 + $0x4c8] sm:$0xff]
      %v2017 = vld [vmem:[%s166 + $0x4d0] sm:$0xff]
      %v2018 = vld [vmem:[%s166 + $0x4d8] sm:$0xff]
      %v2019 = vld [vmem:[%s166 + $0x4e0] sm:$0xff]
      %v2020 = vld [vmem:[%s166 + $0x4e8] sm:$0xff]
      %v2021 = vld [vmem:[%s166 + $0x4f0] sm:$0xff]
      %v2022 = vld [vmem:[%s166 + $0x4f8] sm:$0xff]
      %v2023 = vld [vmem:[%s166 + $0x500] sm:$0xff]
      %v2024 = vld [vmem:[%s166 + $0x508] sm:$0xff]
      %v2025 = vld [vmem:[%s166 + $0x510] sm:$0xff]
      %v2026 = vld [vmem:[%s166 + $0x518] sm:$0xff]
      %v2027 = vld [vmem:[%s166 + $0x520] sm:$0xff]
      %v2028 = vld [vmem:[%s166 + $0x528] sm:$0xff]
      %v2029 = vld [vmem:[%s166 + $0x530] sm:$0xff]
      %v2030 = vld [vmem:[%s166 + $0x538] sm:$0xff]
      %v2031 = vld [vmem:[%s166 + $0x540] sm:$0xff]
      %v2032 = vld [vmem:[%s166 + $0x548] sm:$0xff]
      %v2033 = vld [vmem:[%s166 + $0x550] sm:$0xff]
      %v2034 = vld [vmem:[%s166 + $0x558] sm:$0xff]
      %v2035 = vld [vmem:[%s166 + $0x560] sm:$0xff]
      %v2036 = vld [vmem:[%s166 + $0x568] sm:$0xff]
      %v2037 = vld [vmem:[%s166 + $0x570] sm:$0xff]
      %v2038 = vld [vmem:[%s166 + $0x578] sm:$0xff]
      %2039 = vadd.xlane.f32.xlu0 %v1687
      %v2040 = vpop.xlane.xlu0 %2039
      %2041 = vadd.xlane.f32.xlu0 %v1688
      %v2042 = vpop.xlane.xlu0 %2041
      %2043 = vadd.xlane.f32.xlu0 %v1689
      %v2044 = vpop.xlane.xlu0 %2043
      %2045 = vadd.xlane.f32.xlu0 %v1690
      %v2046 = vpop.xlane.xlu0 %2045
      %2047 = vadd.xlane.f32.xlu0 %v1691
      %v2048 = vpop.xlane.xlu0 %2047
      %2049 = vadd.xlane.f32.xlu0 %v1692
      %v2050 = vpop.xlane.xlu0 %2049
      %2051 = vadd.xlane.f32.xlu0 %v1693
      %v2052 = vpop.xlane.xlu0 %2051
      %2053 = vadd.xlane.f32.xlu0 %v1694
      %v2054 = vpop.xlane.xlu0 %2053
      %2055 = vadd.xlane.f32.xlu0 %v1695
      %v2056 = vpop.xlane.xlu0 %2055
      %2057 = vadd.xlane.f32.xlu0 %v1696
      %v2058 = vpop.xlane.xlu0 %2057
      %2059 = vadd.xlane.f32.xlu0 %v1697
      %v2060 = vpop.xlane.xlu0 %2059
      %2061 = vadd.xlane.f32.xlu0 %v1698
      %v2062 = vpop.xlane.xlu0 %2061
      %2063 = vadd.xlane.f32.xlu0 %v1699
      %v2064 = vpop.xlane.xlu0 %2063
      %2065 = vadd.xlane.f32.xlu0 %v1700
      %v2066 = vpop.xlane.xlu0 %2065
      %2067 = vadd.xlane.f32.xlu0 %v1701
      %v2068 = vpop.xlane.xlu0 %2067
      %2069 = vadd.xlane.f32.xlu0 %v1702
      %v2070 = vpop.xlane.xlu0 %2069
      %2071 = vadd.xlane.f32.xlu0 %v1703
      %v2072 = vpop.xlane.xlu0 %2071
      %2073 = vadd.xlane.f32.xlu0 %v1704
      %v2074 = vpop.xlane.xlu0 %2073
      %2075 = vadd.xlane.f32.xlu0 %v1705
      %v2076 = vpop.xlane.xlu0 %2075
      %2077 = vadd.xlane.f32.xlu0 %v1706
      %v2078 = vpop.xlane.xlu0 %2077
      %2079 = vadd.xlane.f32.xlu0 %v1707
      %v2080 = vpop.xlane.xlu0 %2079
      %2081 = vadd.xlane.f32.xlu0 %v1708
      %v2082 = vpop.xlane.xlu0 %2081
      %2083 = vadd.xlane.f32.xlu0 %v1709
      %v2084 = vpop.xlane.xlu0 %2083
      %2085 = vadd.xlane.f32.xlu0 %v1710
      %v2086 = vpop.xlane.xlu0 %2085
      %2087 = vadd.xlane.f32.xlu0 %v1711
      %v2088 = vpop.xlane.xlu0 %2087
      %2089 = vadd.xlane.f32.xlu0 %v1712
      %v2090 = vpop.xlane.xlu0 %2089
      %2091 = vadd.xlane.f32.xlu0 %v1713
      %v2092 = vpop.xlane.xlu0 %2091
      %2093 = vadd.xlane.f32.xlu0 %v1714
      %v2094 = vpop.xlane.xlu0 %2093
      %2095 = vadd.xlane.f32.xlu0 %v1715
      %v2096 = vpop.xlane.xlu0 %2095
      %2097 = vadd.xlane.f32.xlu0 %v1716
      %v2098 = vpop.xlane.xlu0 %2097
      %2099 = vadd.xlane.f32.xlu0 %v1717
      %v2100 = vpop.xlane.xlu0 %2099
      %2101 = vadd.xlane.f32.xlu0 %v1718
      %v2102 = vpop.xlane.xlu0 %2101
      %2103 = vadd.xlane.f32.xlu0 %v1719
      %v2104 = vpop.xlane.xlu0 %2103
      %2105 = vadd.xlane.f32.xlu0 %v1720
      %v2106 = vpop.xlane.xlu0 %2105
      %2107 = vadd.xlane.f32.xlu0 %v1721
      %v2108 = vpop.xlane.xlu0 %2107
      %2109 = vadd.xlane.f32.xlu0 %v1722
      %v2110 = vpop.xlane.xlu0 %2109
      %2111 = vadd.xlane.f32.xlu0 %v1723
      %v2112 = vpop.xlane.xlu0 %2111
      %2113 = vadd.xlane.f32.xlu0 %v1724
      %v2114 = vpop.xlane.xlu0 %2113
      %2115 = vadd.xlane.f32.xlu0 %v1725
      %v2116 = vpop.xlane.xlu0 %2115
      %2117 = vadd.xlane.f32.xlu0 %v1726
      %v2118 = vpop.xlane.xlu0 %2117
      %2119 = vadd.xlane.f32.xlu0 %v1727
      %v2120 = vpop.xlane.xlu0 %2119
      %2121 = vadd.xlane.f32.xlu0 %v1728
      %v2122 = vpop.xlane.xlu0 %2121
      %2123 = vadd.xlane.f32.xlu0 %v1729
      %v2124 = vpop.xlane.xlu0 %2123
      %2125 = vadd.xlane.f32.xlu0 %v1730
      %v2126 = vpop.xlane.xlu0 %2125
      %2127 = vadd.xlane.f32.xlu0 %v1731
      %v2128 = vpop.xlane.xlu0 %2127
      %2129 = vadd.xlane.f32.xlu0 %v1732
      %v2130 = vpop.xlane.xlu0 %2129
      %2131 = vadd.xlane.f32.xlu0 %v1733
      %v2132 = vpop.xlane.xlu0 %2131
      %2133 = vadd.xlane.f32.xlu0 %v1734
      %v2134 = vpop.xlane.xlu0 %2133
      %2135 = vadd.xlane.f32.xlu0 %v1735
      %v2136 = vpop.xlane.xlu0 %2135
      %2137 = vadd.xlane.f32.xlu0 %v1736
      %v2138 = vpop.xlane.xlu0 %2137
      %2139 = vadd.xlane.f32.xlu0 %v1737
      %v2140 = vpop.xlane.xlu0 %2139
      %2141 = vadd.xlane.f32.xlu0 %v1738
      %v2142 = vpop.xlane.xlu0 %2141
      %2143 = vadd.xlane.f32.xlu0 %v1739
      %v2144 = vpop.xlane.xlu0 %2143
      %2145 = vadd.xlane.f32.xlu0 %v1740
      %v2146 = vpop.xlane.xlu0 %2145
      %2147 = vadd.xlane.f32.xlu0 %v1741
      %v2148 = vpop.xlane.xlu0 %2147
      %2149 = vadd.xlane.f32.xlu0 %v1742
      %v2150 = vpop.xlane.xlu0 %2149
      %2151 = vadd.xlane.f32.xlu0 %v1743
      %v2152 = vpop.xlane.xlu0 %2151
      %2153 = vadd.xlane.f32.xlu0 %v1744
      %v2154 = vpop.xlane.xlu0 %2153
      %2155 = vadd.xlane.f32.xlu0 %v1745
      %v2156 = vpop.xlane.xlu0 %2155
      %2157 = vadd.xlane.f32.xlu0 %v1746
      %v2158 = vpop.xlane.xlu0 %2157
      %2159 = vadd.xlane.f32.xlu0 %v1747
      %v2160 = vpop.xlane.xlu0 %2159
      %2161 = vadd.xlane.f32.xlu0 %v1748
      %v2162 = vpop.xlane.xlu0 %2161
      %2163 = vadd.xlane.f32.xlu0 %v1749
      %v2164 = vpop.xlane.xlu0 %2163
      %2165 = vadd.xlane.f32.xlu0 %v1750
      %v2166 = vpop.xlane.xlu0 %2165
      %2167 = vadd.xlane.f32.xlu0 %v1751
      %v2168 = vpop.xlane.xlu0 %2167
      %2169 = vadd.xlane.f32.xlu0 %v1752
      %v2170 = vpop.xlane.xlu0 %2169
      %2171 = vadd.xlane.f32.xlu0 %v1753
      %v2172 = vpop.xlane.xlu0 %2171
      %2173 = vadd.xlane.f32.xlu0 %v1754
      %v2174 = vpop.xlane.xlu0 %2173
      %2175 = vadd.xlane.f32.xlu0 %v1755
      %v2176 = vpop.xlane.xlu0 %2175
      %2177 = vadd.xlane.f32.xlu0 %v1756
      %v2178 = vpop.xlane.xlu0 %2177
      %2179 = vadd.xlane.f32.xlu0 %v1757
      %v2180 = vpop.xlane.xlu0 %2179
      %2181 = vadd.xlane.f32.xlu0 %v1758
      %v2182 = vpop.xlane.xlu0 %2181
      %2183 = vadd.xlane.f32.xlu0 %v1759
      %v2184 = vpop.xlane.xlu0 %2183
      %2185 = vadd.xlane.f32.xlu0 %v1760
      %v2186 = vpop.xlane.xlu0 %2185
      %2187 = vadd.xlane.f32.xlu0 %v1761
      %v2188 = vpop.xlane.xlu0 %2187
      %2189 = vadd.xlane.f32.xlu0 %v1762
      %v2190 = vpop.xlane.xlu0 %2189
      %2191 = vadd.xlane.f32.xlu0 %v1763
      %v2192 = vpop.xlane.xlu0 %2191
      %2193 = vadd.xlane.f32.xlu0 %v1764
      %v2194 = vpop.xlane.xlu0 %2193
      %2195 = vadd.xlane.f32.xlu0 %v1765
      %v2196 = vpop.xlane.xlu0 %2195
      %2197 = vadd.xlane.f32.xlu0 %v1766
      %v2198 = vpop.xlane.xlu0 %2197
      %2199 = vadd.xlane.f32.xlu0 %v1767
      %v2200 = vpop.xlane.xlu0 %2199
      %2201 = vadd.xlane.f32.xlu0 %v1768
      %v2202 = vpop.xlane.xlu0 %2201
      %2203 = vadd.xlane.f32.xlu0 %v1769
      %v2204 = vpop.xlane.xlu0 %2203
      %2205 = vadd.xlane.f32.xlu0 %v1770
      %v2206 = vpop.xlane.xlu0 %2205
      %2207 = vadd.xlane.f32.xlu0 %v1771
      %v2208 = vpop.xlane.xlu0 %2207
      %2209 = vadd.xlane.f32.xlu0 %v1772
      %v2210 = vpop.xlane.xlu0 %2209
      %2211 = vadd.xlane.f32.xlu0 %v1773
      %v2212 = vpop.xlane.xlu0 %2211
      %2213 = vadd.xlane.f32.xlu0 %v1774
      %v2214 = vpop.xlane.xlu0 %2213
      %2215 = vadd.xlane.f32.xlu0 %v1775
      %v2216 = vpop.xlane.xlu0 %2215
      %2217 = vadd.xlane.f32.xlu0 %v1776
      %v2218 = vpop.xlane.xlu0 %2217
      %2219 = vadd.xlane.f32.xlu0 %v1777
      %v2220 = vpop.xlane.xlu0 %2219
      %2221 = vadd.xlane.f32.xlu0 %v1778
      %v2222 = vpop.xlane.xlu0 %2221
      %2223 = vadd.xlane.f32.xlu0 %v1779
      %v2224 = vpop.xlane.xlu0 %2223
      %2225 = vadd.xlane.f32.xlu0 %v1780
      %v2226 = vpop.xlane.xlu0 %2225
      %2227 = vadd.xlane.f32.xlu0 %v1781
      %v2228 = vpop.xlane.xlu0 %2227
      %2229 = vadd.xlane.f32.xlu0 %v1782
      %v2230 = vpop.xlane.xlu0 %2229
      %2231 = vadd.xlane.f32.xlu0 %v1783
      %v2232 = vpop.xlane.xlu0 %2231
      %2233 = vadd.xlane.f32.xlu0 %v1784
      %v2234 = vpop.xlane.xlu0 %2233
      %2235 = vadd.xlane.f32.xlu0 %v1785
      %v2236 = vpop.xlane.xlu0 %2235
      %2237 = vadd.xlane.f32.xlu0 %v1786
      %v2238 = vpop.xlane.xlu0 %2237
      %2239 = vadd.xlane.f32.xlu0 %v1787
      %v2240 = vpop.xlane.xlu0 %2239
      %2241 = vadd.xlane.f32.xlu0 %v1788
      %v2242 = vpop.xlane.xlu0 %2241
      %2243 = vadd.xlane.f32.xlu0 %v1789
      %v2244 = vpop.xlane.xlu0 %2243
      %2245 = vadd.xlane.f32.xlu0 %v1790
      %v2246 = vpop.xlane.xlu0 %2245
      %2247 = vadd.xlane.f32.xlu0 %v1791
      %v2248 = vpop.xlane.xlu0 %2247
      %2249 = vadd.xlane.f32.xlu0 %v1792
      %v2250 = vpop.xlane.xlu0 %2249
      %2251 = vadd.xlane.f32.xlu0 %v1793
      %v2252 = vpop.xlane.xlu0 %2251
      %2253 = vadd.xlane.f32.xlu0 %v1794
      %v2254 = vpop.xlane.xlu0 %2253
      %2255 = vadd.xlane.f32.xlu0 %v1795
      %v2256 = vpop.xlane.xlu0 %2255
      %2257 = vadd.xlane.f32.xlu0 %v1796
      %v2258 = vpop.xlane.xlu0 %2257
      %2259 = vadd.xlane.f32.xlu0 %v1797
      %v2260 = vpop.xlane.xlu0 %2259
      %2261 = vadd.xlane.f32.xlu0 %v1798
      %v2262 = vpop.xlane.xlu0 %2261
      %2263 = vadd.xlane.f32.xlu0 %v1799
      %v2264 = vpop.xlane.xlu0 %2263
      %2265 = vadd.xlane.f32.xlu0 %v1800
      %v2266 = vpop.xlane.xlu0 %2265
      %2267 = vadd.xlane.f32.xlu0 %v1801
      %v2268 = vpop.xlane.xlu0 %2267
      %2269 = vadd.xlane.f32.xlu0 %v1802
      %v2270 = vpop.xlane.xlu0 %2269
      %2271 = vadd.xlane.f32.xlu0 %v1803
      %v2272 = vpop.xlane.xlu0 %2271
      %2273 = vadd.xlane.f32.xlu0 %v1804
      %v2274 = vpop.xlane.xlu0 %2273
      %2275 = vadd.xlane.f32.xlu0 %v1805
      %v2276 = vpop.xlane.xlu0 %2275
      %2277 = vadd.xlane.f32.xlu0 %v1806
      %v2278 = vpop.xlane.xlu0 %2277
      %2279 = vadd.xlane.f32.xlu0 %v1807
      %v2280 = vpop.xlane.xlu0 %2279
      %2281 = vadd.xlane.f32.xlu0 %v1808
      %v2282 = vpop.xlane.xlu0 %2281
      %2283 = vadd.xlane.f32.xlu0 %v1809
      %v2284 = vpop.xlane.xlu0 %2283
      %2285 = vadd.xlane.f32.xlu0 %v1810
      %v2286 = vpop.xlane.xlu0 %2285
      %2287 = vadd.xlane.f32.xlu0 %v1811
      %v2288 = vpop.xlane.xlu0 %2287
      %2289 = vadd.xlane.f32.xlu0 %v1812
      %v2290 = vpop.xlane.xlu0 %2289
      %2291 = vadd.xlane.f32.xlu0 %v1813
      %v2292 = vpop.xlane.xlu0 %2291
      %2293 = vadd.xlane.f32.xlu0 %v1814
      %v2294 = vpop.xlane.xlu0 %2293
      %2295 = vadd.xlane.f32.xlu0 %v1815
      %v2296 = vpop.xlane.xlu0 %2295
      %2297 = vadd.xlane.f32.xlu0 %v1816
      %v2298 = vpop.xlane.xlu0 %2297
      %2299 = vadd.xlane.f32.xlu0 %v1817
      %v2300 = vpop.xlane.xlu0 %2299
      %2301 = vadd.xlane.f32.xlu0 %v1818
      %v2302 = vpop.xlane.xlu0 %2301
      %2303 = vadd.xlane.f32.xlu0 %v1819
      %v2304 = vpop.xlane.xlu0 %2303
      %2305 = vadd.xlane.f32.xlu0 %v1820
      %v2306 = vpop.xlane.xlu0 %2305
      %2307 = vadd.xlane.f32.xlu0 %v1821
      %v2308 = vpop.xlane.xlu0 %2307
      %2309 = vadd.xlane.f32.xlu0 %v1822
      %v2310 = vpop.xlane.xlu0 %2309
      %2311 = vadd.xlane.f32.xlu0 %v1823
      %v2312 = vpop.xlane.xlu0 %2311
      %2313 = vadd.xlane.f32.xlu0 %v1824
      %v2314 = vpop.xlane.xlu0 %2313
      %2315 = vadd.xlane.f32.xlu0 %v1825
      %v2316 = vpop.xlane.xlu0 %2315
      %2317 = vadd.xlane.f32.xlu0 %v1826
      %v2318 = vpop.xlane.xlu0 %2317
      %2319 = vadd.xlane.f32.xlu0 %v1827
      %v2320 = vpop.xlane.xlu0 %2319
      %2321 = vadd.xlane.f32.xlu0 %v1828
      %v2322 = vpop.xlane.xlu0 %2321
      %2323 = vadd.xlane.f32.xlu0 %v1829
      %v2324 = vpop.xlane.xlu0 %2323
      %2325 = vadd.xlane.f32.xlu0 %v1830
      %v2326 = vpop.xlane.xlu0 %2325
      %2327 = vadd.xlane.f32.xlu0 %v1831
      %v2328 = vpop.xlane.xlu0 %2327
      %2329 = vadd.xlane.f32.xlu0 %v1832
      %v2330 = vpop.xlane.xlu0 %2329
      %2331 = vadd.xlane.f32.xlu0 %v1833
      %v2332 = vpop.xlane.xlu0 %2331
      %2333 = vadd.xlane.f32.xlu0 %v1834
      %v2334 = vpop.xlane.xlu0 %2333
      %2335 = vadd.xlane.f32.xlu0 %v1835
      %v2336 = vpop.xlane.xlu0 %2335
      %2337 = vadd.xlane.f32.xlu0 %v1836
      %v2338 = vpop.xlane.xlu0 %2337
      %2339 = vadd.xlane.f32.xlu0 %v1837
      %v2340 = vpop.xlane.xlu0 %2339
      %2341 = vadd.xlane.f32.xlu0 %v1838
      %v2342 = vpop.xlane.xlu0 %2341
      %2343 = vadd.xlane.f32.xlu0 %v1839
      %v2344 = vpop.xlane.xlu0 %2343
      %2345 = vadd.xlane.f32.xlu0 %v1840
      %v2346 = vpop.xlane.xlu0 %2345
      %2347 = vadd.xlane.f32.xlu0 %v1841
      %v2348 = vpop.xlane.xlu0 %2347
      %2349 = vadd.xlane.f32.xlu0 %v1842
      %v2350 = vpop.xlane.xlu0 %2349
      %2351 = vadd.xlane.f32.xlu0 %v1843
      %v2352 = vpop.xlane.xlu0 %2351
      %2353 = vadd.xlane.f32.xlu0 %v1844
      %v2354 = vpop.xlane.xlu0 %2353
      %2355 = vadd.xlane.f32.xlu0 %v1845
      %v2356 = vpop.xlane.xlu0 %2355
      %2357 = vadd.xlane.f32.xlu0 %v1846
      %v2358 = vpop.xlane.xlu0 %2357
      %2359 = vadd.xlane.f32.xlu0 %v1847
      %v2360 = vpop.xlane.xlu0 %2359
      %2361 = vadd.xlane.f32.xlu0 %v1848
      %v2362 = vpop.xlane.xlu0 %2361
      %2363 = vadd.xlane.f32.xlu0 %v1849
      %v2364 = vpop.xlane.xlu0 %2363
      %2365 = vadd.xlane.f32.xlu0 %v1850
      %v2366 = vpop.xlane.xlu0 %2365
      %2367 = vadd.xlane.f32.xlu0 %v1851
      %v2368 = vpop.xlane.xlu0 %2367
      %2369 = vadd.xlane.f32.xlu0 %v1852
      %v2370 = vpop.xlane.xlu0 %2369
      %2371 = vadd.xlane.f32.xlu0 %v1853
      %v2372 = vpop.xlane.xlu0 %2371
      %2373 = vadd.xlane.f32.xlu0 %v1854
      %v2374 = vpop.xlane.xlu0 %2373
      %2375 = vadd.xlane.f32.xlu0 %v1855
      %v2376 = vpop.xlane.xlu0 %2375
      %2377 = vadd.xlane.f32.xlu0 %v1856
      %v2378 = vpop.xlane.xlu0 %2377
      %2379 = vadd.xlane.f32.xlu0 %v1857
      %v2380 = vpop.xlane.xlu0 %2379
      %2381 = vadd.xlane.f32.xlu0 %v1858
      %v2382 = vpop.xlane.xlu0 %2381
      %2383 = vadd.xlane.f32.xlu0 %v1859
      %v2384 = vpop.xlane.xlu0 %2383
      %2385 = vadd.xlane.f32.xlu0 %v1860
      %v2386 = vpop.xlane.xlu0 %2385
      %2387 = vadd.xlane.f32.xlu0 %v1861
      %v2388 = vpop.xlane.xlu0 %2387
      %2389 = vadd.xlane.f32.xlu0 %v1862
      %v2390 = vpop.xlane.xlu0 %2389
      %v2391 = vadd.f32 %v1863, %v2040
      %v2392 = vadd.f32 %v1864, %v2042
      %v2393 = vadd.f32 %v1865, %v2044
      %v2394 = vadd.f32 %v1866, %v2046
      %v2395 = vadd.f32 %v1867, %v2048
      %v2396 = vadd.f32 %v1868, %v2050
      %v2397 = vadd.f32 %v1869, %v2052
      %v2398 = vadd.f32 %v1870, %v2054
      %v2399 = vadd.f32 %v1871, %v2056
      %v2400 = vadd.f32 %v1872, %v2058
      %v2401 = vadd.f32 %v1873, %v2060
      %v2402 = vadd.f32 %v1874, %v2062
      %v2403 = vadd.f32 %v1875, %v2064
      %v2404 = vadd.f32 %v1876, %v2066
      %v2405 = vadd.f32 %v1877, %v2068
      %v2406 = vadd.f32 %v1878, %v2070
      %v2407 = vadd.f32 %v1879, %v2072
      %v2408 = vadd.f32 %v1880, %v2074
      %v2409 = vadd.f32 %v1881, %v2076
      %v2410 = vadd.f32 %v1882, %v2078
      %v2411 = vadd.f32 %v1883, %v2080
      %v2412 = vadd.f32 %v1884, %v2082
      %v2413 = vadd.f32 %v1885, %v2084
      %v2414 = vadd.f32 %v1886, %v2086
      %v2415 = vadd.f32 %v1887, %v2088
      %v2416 = vadd.f32 %v1888, %v2090
      %v2417 = vadd.f32 %v1889, %v2092
      %v2418 = vadd.f32 %v1890, %v2094
      %v2419 = vadd.f32 %v1891, %v2096
      %v2420 = vadd.f32 %v1892, %v2098
      %v2421 = vadd.f32 %v1893, %v2100
      %v2422 = vadd.f32 %v1894, %v2102
      %v2423 = vadd.f32 %v1895, %v2104
      %v2424 = vadd.f32 %v1896, %v2106
      %v2425 = vadd.f32 %v1897, %v2108
      %v2426 = vadd.f32 %v1898, %v2110
      %v2427 = vadd.f32 %v1899, %v2112
      %v2428 = vadd.f32 %v1900, %v2114
      %v2429 = vadd.f32 %v1901, %v2116
      %v2430 = vadd.f32 %v1902, %v2118
      %v2431 = vadd.f32 %v1903, %v2120
      %v2432 = vadd.f32 %v1904, %v2122
      %v2433 = vadd.f32 %v1905, %v2124
      %v2434 = vadd.f32 %v1906, %v2126
      %v2435 = vadd.f32 %v1907, %v2128
      %v2436 = vadd.f32 %v1908, %v2130
      %v2437 = vadd.f32 %v1909, %v2132
      %v2438 = vadd.f32 %v1910, %v2134
      %v2439 = vadd.f32 %v1911, %v2136
      %v2440 = vadd.f32 %v1912, %v2138
      %v2441 = vadd.f32 %v1913, %v2140
      %v2442 = vadd.f32 %v1914, %v2142
      %v2443 = vadd.f32 %v1915, %v2144
      %v2444 = vadd.f32 %v1916, %v2146
      %v2445 = vadd.f32 %v1917, %v2148
      %v2446 = vadd.f32 %v1918, %v2150
      %v2447 = vadd.f32 %v1919, %v2152
      %v2448 = vadd.f32 %v1920, %v2154
      %v2449 = vadd.f32 %v1921, %v2156
      %v2450 = vadd.f32 %v1922, %v2158
      %v2451 = vadd.f32 %v1923, %v2160
      %v2452 = vadd.f32 %v1924, %v2162
      %v2453 = vadd.f32 %v1925, %v2164
      %v2454 = vadd.f32 %v1926, %v2166
      %v2455 = vadd.f32 %v1927, %v2168
      %v2456 = vadd.f32 %v1928, %v2170
      %v2457 = vadd.f32 %v1929, %v2172
      %v2458 = vadd.f32 %v1930, %v2174
      %v2459 = vadd.f32 %v1931, %v2176
      %v2460 = vadd.f32 %v1932, %v2178
      %v2461 = vadd.f32 %v1933, %v2180
      %v2462 = vadd.f32 %v1934, %v2182
      %v2463 = vadd.f32 %v1935, %v2184
      %v2464 = vadd.f32 %v1936, %v2186
      %v2465 = vadd.f32 %v1937, %v2188
      %v2466 = vadd.f32 %v1938, %v2190
      %v2467 = vadd.f32 %v1939, %v2192
      %v2468 = vadd.f32 %v1940, %v2194
      %v2469 = vadd.f32 %v1941, %v2196
      %v2470 = vadd.f32 %v1942, %v2198
      %v2471 = vadd.f32 %v1943, %v2200
      %v2472 = vadd.f32 %v1944, %v2202
      %v2473 = vadd.f32 %v1945, %v2204
      %v2474 = vadd.f32 %v1946, %v2206
      %v2475 = vadd.f32 %v1947, %v2208
      %v2476 = vadd.f32 %v1948, %v2210
      %v2477 = vadd.f32 %v1949, %v2212
      %v2478 = vadd.f32 %v1950, %v2214
      %v2479 = vadd.f32 %v1951, %v2216
      %v2480 = vadd.f32 %v1952, %v2218
      %v2481 = vadd.f32 %v1953, %v2220
      %v2482 = vadd.f32 %v1954, %v2222
      %v2483 = vadd.f32 %v1955, %v2224
      %v2484 = vadd.f32 %v1956, %v2226
      %v2485 = vadd.f32 %v1957, %v2228
      %v2486 = vadd.f32 %v1958, %v2230
      %v2487 = vadd.f32 %v1959, %v2232
      %v2488 = vadd.f32 %v1960, %v2234
      %v2489 = vadd.f32 %v1961, %v2236
      %v2490 = vadd.f32 %v1962, %v2238
      %v2491 = vadd.f32 %v1963, %v2240
      %v2492 = vadd.f32 %v1964, %v2242
      %v2493 = vadd.f32 %v1965, %v2244
      %v2494 = vadd.f32 %v1966, %v2246
      %v2495 = vadd.f32 %v1967, %v2248
      %v2496 = vadd.f32 %v1968, %v2250
      %v2497 = vadd.f32 %v1969, %v2252
      %v2498 = vadd.f32 %v1970, %v2254
      %v2499 = vadd.f32 %v1971, %v2256
      %v2500 = vadd.f32 %v1972, %v2258
      %v2501 = vadd.f32 %v1973, %v2260
      %v2502 = vadd.f32 %v1974, %v2262
      %v2503 = vadd.f32 %v1975, %v2264
      %v2504 = vadd.f32 %v1976, %v2266
      %v2505 = vadd.f32 %v1977, %v2268
      %v2506 = vadd.f32 %v1978, %v2270
      %v2507 = vadd.f32 %v1979, %v2272
      %v2508 = vadd.f32 %v1980, %v2274
      %v2509 = vadd.f32 %v1981, %v2276
      %v2510 = vadd.f32 %v1982, %v2278
      %v2511 = vadd.f32 %v1983, %v2280
      %v2512 = vadd.f32 %v1984, %v2282
      %v2513 = vadd.f32 %v1985, %v2284
      %v2514 = vadd.f32 %v1986, %v2286
      %v2515 = vadd.f32 %v1987, %v2288
      %v2516 = vadd.f32 %v1988, %v2290
      %v2517 = vadd.f32 %v1989, %v2292
      %v2518 = vadd.f32 %v1990, %v2294
      %v2519 = vadd.f32 %v1991, %v2296
      %v2520 = vadd.f32 %v1992, %v2298
      %v2521 = vadd.f32 %v1993, %v2300
      %v2522 = vadd.f32 %v1994, %v2302
      %v2523 = vadd.f32 %v1995, %v2304
      %v2524 = vadd.f32 %v1996, %v2306
      %v2525 = vadd.f32 %v1997, %v2308
      %v2526 = vadd.f32 %v1998, %v2310
      %v2527 = vadd.f32 %v1999, %v2312
      %v2528 = vadd.f32 %v2000, %v2314
      %v2529 = vadd.f32 %v2001, %v2316
      %v2530 = vadd.f32 %v2002, %v2318
      %v2531 = vadd.f32 %v2003, %v2320
      %v2532 = vadd.f32 %v2004, %v2322
      %v2533 = vadd.f32 %v2005, %v2324
      %v2534 = vadd.f32 %v2006, %v2326
      %v2535 = vadd.f32 %v2007, %v2328
      %v2536 = vadd.f32 %v2008, %v2330
      %v2537 = vadd.f32 %v2009, %v2332
      %v2538 = vadd.f32 %v2010, %v2334
      %v2539 = vadd.f32 %v2011, %v2336
      %v2540 = vadd.f32 %v2012, %v2338
      %v2541 = vadd.f32 %v2013, %v2340
      %v2542 = vadd.f32 %v2014, %v2342
      %v2543 = vadd.f32 %v2015, %v2344
      %v2544 = vadd.f32 %v2016, %v2346
      %v2545 = vadd.f32 %v2017, %v2348
      %v2546 = vadd.f32 %v2018, %v2350
      %v2547 = vadd.f32 %v2019, %v2352
      %v2548 = vadd.f32 %v2020, %v2354
      %v2549 = vadd.f32 %v2021, %v2356
      %v2550 = vadd.f32 %v2022, %v2358
      %v2551 = vadd.f32 %v2023, %v2360
      %v2552 = vadd.f32 %v2024, %v2362
      %v2553 = vadd.f32 %v2025, %v2364
      %v2554 = vadd.f32 %v2026, %v2366
      %v2555 = vadd.f32 %v2027, %v2368
      %v2556 = vadd.f32 %v2028, %v2370
      %v2557 = vadd.f32 %v2029, %v2372
      %v2558 = vadd.f32 %v2030, %v2374
      %v2559 = vadd.f32 %v2031, %v2376
      %v2560 = vadd.f32 %v2032, %v2378
      %v2561 = vadd.f32 %v2033, %v2380
      %v2562 = vadd.f32 %v2034, %v2382
      %v2563 = vadd.f32 %v2035, %v2384
      %v2564 = vadd.f32 %v2036, %v2386
      %v2565 = vadd.f32 %v2037, %v2388
      %v2566 = vadd.f32 %v2038, %v2390
      %vm2567 = vcmask 7168
      %2568 = vst.msk [vmem:[%s166] sm:$0xff] %vm2567, %v2391
      %2569 = vst.msk [vmem:[%s166 + $0x8] sm:$0xff] %vm2567, %v2392
      %2570 = vst.msk [vmem:[%s166 + $0x10] sm:$0xff] %vm2567, %v2393
      %2571 = vst.msk [vmem:[%s166 + $0x18] sm:$0xff] %vm2567, %v2394
      %2572 = vst.msk [vmem:[%s166 + $0x20] sm:$0xff] %vm2567, %v2395
      %2573 = vst.msk [vmem:[%s166 + $0x28] sm:$0xff] %vm2567, %v2396
      %2574 = vst.msk [vmem:[%s166 + $0x30] sm:$0xff] %vm2567, %v2397
      %2575 = vst.msk [vmem:[%s166 + $0x38] sm:$0xff] %vm2567, %v2398
      %2576 = vst.msk [vmem:[%s166 + $0x40] sm:$0xff] %vm2567, %v2399
      %2577 = vst.msk [vmem:[%s166 + $0x48] sm:$0xff] %vm2567, %v2400
      %2578 = vst.msk [vmem:[%s166 + $0x50] sm:$0xff] %vm2567, %v2401
      %2579 = vst.msk [vmem:[%s166 + $0x58] sm:$0xff] %vm2567, %v2402
      %2580 = vst.msk [vmem:[%s166 + $0x60] sm:$0xff] %vm2567, %v2403
      %2581 = vst.msk [vmem:[%s166 + $0x68] sm:$0xff] %vm2567, %v2404
      %2582 = vst.msk [vmem:[%s166 + $0x70] sm:$0xff] %vm2567, %v2405
      %2583 = vst.msk [vmem:[%s166 + $0x78] sm:$0xff] %vm2567, %v2406
      %2584 = vst.msk [vmem:[%s166 + $0x80] sm:$0xff] %vm2567, %v2407
      %2585 = vst.msk [vmem:[%s166 + $0x88] sm:$0xff] %vm2567, %v2408
      %2586 = vst.msk [vmem:[%s166 + $0x90] sm:$0xff] %vm2567, %v2409
      %2587 = vst.msk [vmem:[%s166 + $0x98] sm:$0xff] %vm2567, %v2410
      %2588 = vst.msk [vmem:[%s166 + $0xa0] sm:$0xff] %vm2567, %v2411
      %2589 = vst.msk [vmem:[%s166 + $0xa8] sm:$0xff] %vm2567, %v2412
      %2590 = vst.msk [vmem:[%s166 + $0xb0] sm:$0xff] %vm2567, %v2413
      %2591 = vst.msk [vmem:[%s166 + $0xb8] sm:$0xff] %vm2567, %v2414
      %2592 = vst.msk [vmem:[%s166 + $0xc0] sm:$0xff] %vm2567, %v2415
      %2593 = vst.msk [vmem:[%s166 + $0xc8] sm:$0xff] %vm2567, %v2416
      %2594 = vst.msk [vmem:[%s166 + $0xd0] sm:$0xff] %vm2567, %v2417
      %2595 = vst.msk [vmem:[%s166 + $0xd8] sm:$0xff] %vm2567, %v2418
      %2596 = vst.msk [vmem:[%s166 + $0xe0] sm:$0xff] %vm2567, %v2419
      %2597 = vst.msk [vmem:[%s166 + $0xe8] sm:$0xff] %vm2567, %v2420
      %2598 = vst.msk [vmem:[%s166 + $0xf0] sm:$0xff] %vm2567, %v2421
      %2599 = vst.msk [vmem:[%s166 + $0xf8] sm:$0xff] %vm2567, %v2422
      %2600 = vst.msk [vmem:[%s166 + $0x100] sm:$0xff] %vm2567, %v2423
      %2601 = vst.msk [vmem:[%s166 + $0x108] sm:$0xff] %vm2567, %v2424
      %2602 = vst.msk [vmem:[%s166 + $0x110] sm:$0xff] %vm2567, %v2425
      %2603 = vst.msk [vmem:[%s166 + $0x118] sm:$0xff] %vm2567, %v2426
      %2604 = vst.msk [vmem:[%s166 + $0x120] sm:$0xff] %vm2567, %v2427
      %2605 = vst.msk [vmem:[%s166 + $0x128] sm:$0xff] %vm2567, %v2428
      %2606 = vst.msk [vmem:[%s166 + $0x130] sm:$0xff] %vm2567, %v2429
      %2607 = vst.msk [vmem:[%s166 + $0x138] sm:$0xff] %vm2567, %v2430
      %2608 = vst.msk [vmem:[%s166 + $0x140] sm:$0xff] %vm2567, %v2431
      %2609 = vst.msk [vmem:[%s166 + $0x148] sm:$0xff] %vm2567, %v2432
      %2610 = vst.msk [vmem:[%s166 + $0x150] sm:$0xff] %vm2567, %v2433
      %2611 = vst.msk [vmem:[%s166 + $0x158] sm:$0xff] %vm2567, %v2434
      %2612 = vst.msk [vmem:[%s166 + $0x160] sm:$0xff] %vm2567, %v2435
      %2613 = vst.msk [vmem:[%s166 + $0x168] sm:$0xff] %vm2567, %v2436
      %2614 = vst.msk [vmem:[%s166 + $0x170] sm:$0xff] %vm2567, %v2437
      %2615 = vst.msk [vmem:[%s166 + $0x178] sm:$0xff] %vm2567, %v2438
      %2616 = vst.msk [vmem:[%s166 + $0x180] sm:$0xff] %vm2567, %v2439
      %2617 = vst.msk [vmem:[%s166 + $0x188] sm:$0xff] %vm2567, %v2440
      %2618 = vst.msk [vmem:[%s166 + $0x190] sm:$0xff] %vm2567, %v2441
      %2619 = vst.msk [vmem:[%s166 + $0x198] sm:$0xff] %vm2567, %v2442
      %2620 = vst.msk [vmem:[%s166 + $0x1a0] sm:$0xff] %vm2567, %v2443
      %2621 = vst.msk [vmem:[%s166 + $0x1a8] sm:$0xff] %vm2567, %v2444
      %2622 = vst.msk [vmem:[%s166 + $0x1b0] sm:$0xff] %vm2567, %v2445
      %2623 = vst.msk [vmem:[%s166 + $0x1b8] sm:$0xff] %vm2567, %v2446
      %2624 = vst.msk [vmem:[%s166 + $0x1c0] sm:$0xff] %vm2567, %v2447
      %2625 = vst.msk [vmem:[%s166 + $0x1c8] sm:$0xff] %vm2567, %v2448
      %2626 = vst.msk [vmem:[%s166 + $0x1d0] sm:$0xff] %vm2567, %v2449
      %2627 = vst.msk [vmem:[%s166 + $0x1d8] sm:$0xff] %vm2567, %v2450
      %2628 = vst.msk [vmem:[%s166 + $0x1e0] sm:$0xff] %vm2567, %v2451
      %2629 = vst.msk [vmem:[%s166 + $0x1e8] sm:$0xff] %vm2567, %v2452
      %2630 = vst.msk [vmem:[%s166 + $0x1f0] sm:$0xff] %vm2567, %v2453
      %2631 = vst.msk [vmem:[%s166 + $0x1f8] sm:$0xff] %vm2567, %v2454
      %2632 = vst.msk [vmem:[%s166 + $0x200] sm:$0xff] %vm2567, %v2455
      %2633 = vst.msk [vmem:[%s166 + $0x208] sm:$0xff] %vm2567, %v2456
      %2634 = vst.msk [vmem:[%s166 + $0x210] sm:$0xff] %vm2567, %v2457
      %2635 = vst.msk [vmem:[%s166 + $0x218] sm:$0xff] %vm2567, %v2458
      %2636 = vst.msk [vmem:[%s166 + $0x220] sm:$0xff] %vm2567, %v2459
      %2637 = vst.msk [vmem:[%s166 + $0x228] sm:$0xff] %vm2567, %v2460
      %2638 = vst.msk [vmem:[%s166 + $0x230] sm:$0xff] %vm2567, %v2461
      %2639 = vst.msk [vmem:[%s166 + $0x238] sm:$0xff] %vm2567, %v2462
      %2640 = vst.msk [vmem:[%s166 + $0x240] sm:$0xff] %vm2567, %v2463
      %2641 = vst.msk [vmem:[%s166 + $0x248] sm:$0xff] %vm2567, %v2464
      %2642 = vst.msk [vmem:[%s166 + $0x250] sm:$0xff] %vm2567, %v2465
      %2643 = vst.msk [vmem:[%s166 + $0x258] sm:$0xff] %vm2567, %v2466
      %2644 = vst.msk [vmem:[%s166 + $0x260] sm:$0xff] %vm2567, %v2467
      %2645 = vst.msk [vmem:[%s166 + $0x268] sm:$0xff] %vm2567, %v2468
      %2646 = vst.msk [vmem:[%s166 + $0x270] sm:$0xff] %vm2567, %v2469
      %2647 = vst.msk [vmem:[%s166 + $0x278] sm:$0xff] %vm2567, %v2470
      %2648 = vst.msk [vmem:[%s166 + $0x280] sm:$0xff] %vm2567, %v2471
      %2649 = vst.msk [vmem:[%s166 + $0x288] sm:$0xff] %vm2567, %v2472
      %2650 = vst.msk [vmem:[%s166 + $0x290] sm:$0xff] %vm2567, %v2473
      %2651 = vst.msk [vmem:[%s166 + $0x298] sm:$0xff] %vm2567, %v2474
      %2652 = vst.msk [vmem:[%s166 + $0x2a0] sm:$0xff] %vm2567, %v2475
      %2653 = vst.msk [vmem:[%s166 + $0x2a8] sm:$0xff] %vm2567, %v2476
      %2654 = vst.msk [vmem:[%s166 + $0x2b0] sm:$0xff] %vm2567, %v2477
      %2655 = vst.msk [vmem:[%s166 + $0x2b8] sm:$0xff] %vm2567, %v2478
      %2656 = vst.msk [vmem:[%s166 + $0x2c0] sm:$0xff] %vm2567, %v2479
      %2657 = vst.msk [vmem:[%s166 + $0x2c8] sm:$0xff] %vm2567, %v2480
      %2658 = vst.msk [vmem:[%s166 + $0x2d0] sm:$0xff] %vm2567, %v2481
      %2659 = vst.msk [vmem:[%s166 + $0x2d8] sm:$0xff] %vm2567, %v2482
      %2660 = vst.msk [vmem:[%s166 + $0x2e0] sm:$0xff] %vm2567, %v2483
      %2661 = vst.msk [vmem:[%s166 + $0x2e8] sm:$0xff] %vm2567, %v2484
      %2662 = vst.msk [vmem:[%s166 + $0x2f0] sm:$0xff] %vm2567, %v2485
      %2663 = vst.msk [vmem:[%s166 + $0x2f8] sm:$0xff] %vm2567, %v2486
      %2664 = vst.msk [vmem:[%s166 + $0x300] sm:$0xff] %vm2567, %v2487
      %2665 = vst.msk [vmem:[%s166 + $0x308] sm:$0xff] %vm2567, %v2488
      %2666 = vst.msk [vmem:[%s166 + $0x310] sm:$0xff] %vm2567, %v2489
      %2667 = vst.msk [vmem:[%s166 + $0x318] sm:$0xff] %vm2567, %v2490
      %2668 = vst.msk [vmem:[%s166 + $0x320] sm:$0xff] %vm2567, %v2491
      %2669 = vst.msk [vmem:[%s166 + $0x328] sm:$0xff] %vm2567, %v2492
      %2670 = vst.msk [vmem:[%s166 + $0x330] sm:$0xff] %vm2567, %v2493
      %2671 = vst.msk [vmem:[%s166 + $0x338] sm:$0xff] %vm2567, %v2494
      %2672 = vst.msk [vmem:[%s166 + $0x340] sm:$0xff] %vm2567, %v2495
      %2673 = vst.msk [vmem:[%s166 + $0x348] sm:$0xff] %vm2567, %v2496
      %2674 = vst.msk [vmem:[%s166 + $0x350] sm:$0xff] %vm2567, %v2497
      %2675 = vst.msk [vmem:[%s166 + $0x358] sm:$0xff] %vm2567, %v2498
      %2676 = vst.msk [vmem:[%s166 + $0x360] sm:$0xff] %vm2567, %v2499
      %2677 = vst.msk [vmem:[%s166 + $0x368] sm:$0xff] %vm2567, %v2500
      %2678 = vst.msk [vmem:[%s166 + $0x370] sm:$0xff] %vm2567, %v2501
      %2679 = vst.msk [vmem:[%s166 + $0x378] sm:$0xff] %vm2567, %v2502
      %2680 = vst.msk [vmem:[%s166 + $0x380] sm:$0xff] %vm2567, %v2503
      %2681 = vst.msk [vmem:[%s166 + $0x388] sm:$0xff] %vm2567, %v2504
      %2682 = vst.msk [vmem:[%s166 + $0x390] sm:$0xff] %vm2567, %v2505
      %2683 = vst.msk [vmem:[%s166 + $0x398] sm:$0xff] %vm2567, %v2506
      %2684 = vst.msk [vmem:[%s166 + $0x3a0] sm:$0xff] %vm2567, %v2507
      %2685 = vst.msk [vmem:[%s166 + $0x3a8] sm:$0xff] %vm2567, %v2508
      %2686 = vst.msk [vmem:[%s166 + $0x3b0] sm:$0xff] %vm2567, %v2509
      %2687 = vst.msk [vmem:[%s166 + $0x3b8] sm:$0xff] %vm2567, %v2510
      %2688 = vst.msk [vmem:[%s166 + $0x3c0] sm:$0xff] %vm2567, %v2511
      %2689 = vst.msk [vmem:[%s166 + $0x3c8] sm:$0xff] %vm2567, %v2512
      %2690 = vst.msk [vmem:[%s166 + $0x3d0] sm:$0xff] %vm2567, %v2513
      %2691 = vst.msk [vmem:[%s166 + $0x3d8] sm:$0xff] %vm2567, %v2514
      %2692 = vst.msk [vmem:[%s166 + $0x3e0] sm:$0xff] %vm2567, %v2515
      %2693 = vst.msk [vmem:[%s166 + $0x3e8] sm:$0xff] %vm2567, %v2516
      %2694 = vst.msk [vmem:[%s166 + $0x3f0] sm:$0xff] %vm2567, %v2517
      %2695 = vst.msk [vmem:[%s166 + $0x3f8] sm:$0xff] %vm2567, %v2518
      %2696 = vst.msk [vmem:[%s166 + $0x400] sm:$0xff] %vm2567, %v2519
      %2697 = vst.msk [vmem:[%s166 + $0x408] sm:$0xff] %vm2567, %v2520
      %2698 = vst.msk [vmem:[%s166 + $0x410] sm:$0xff] %vm2567, %v2521
      %2699 = vst.msk [vmem:[%s166 + $0x418] sm:$0xff] %vm2567, %v2522
      %2700 = vst.msk [vmem:[%s166 + $0x420] sm:$0xff] %vm2567, %v2523
      %2701 = vst.msk [vmem:[%s166 + $0x428] sm:$0xff] %vm2567, %v2524
      %2702 = vst.msk [vmem:[%s166 + $0x430] sm:$0xff] %vm2567, %v2525
      %2703 = vst.msk [vmem:[%s166 + $0x438] sm:$0xff] %vm2567, %v2526
      %2704 = vst.msk [vmem:[%s166 + $0x440] sm:$0xff] %vm2567, %v2527
      %2705 = vst.msk [vmem:[%s166 + $0x448] sm:$0xff] %vm2567, %v2528
      %2706 = vst.msk [vmem:[%s166 + $0x450] sm:$0xff] %vm2567, %v2529
      %2707 = vst.msk [vmem:[%s166 + $0x458] sm:$0xff] %vm2567, %v2530
      %2708 = vst.msk [vmem:[%s166 + $0x460] sm:$0xff] %vm2567, %v2531
      %2709 = vst.msk [vmem:[%s166 + $0x468] sm:$0xff] %vm2567, %v2532
      %2710 = vst.msk [vmem:[%s166 + $0x470] sm:$0xff] %vm2567, %v2533
      %2711 = vst.msk [vmem:[%s166 + $0x478] sm:$0xff] %vm2567, %v2534
      %2712 = vst.msk [vmem:[%s166 + $0x480] sm:$0xff] %vm2567, %v2535
      %2713 = vst.msk [vmem:[%s166 + $0x488] sm:$0xff] %vm2567, %v2536
      %2714 = vst.msk [vmem:[%s166 + $0x490] sm:$0xff] %vm2567, %v2537
      %2715 = vst.msk [vmem:[%s166 + $0x498] sm:$0xff] %vm2567, %v2538
      %2716 = vst.msk [vmem:[%s166 + $0x4a0] sm:$0xff] %vm2567, %v2539
      %2717 = vst.msk [vmem:[%s166 + $0x4a8] sm:$0xff] %vm2567, %v2540
      %2718 = vst.msk [vmem:[%s166 + $0x4b0] sm:$0xff] %vm2567, %v2541
      %2719 = vst.msk [vmem:[%s166 + $0x4b8] sm:$0xff] %vm2567, %v2542
      %2720 = vst.msk [vmem:[%s166 + $0x4c0] sm:$0xff] %vm2567, %v2543
      %2721 = vst.msk [vmem:[%s166 + $0x4c8] sm:$0xff] %vm2567, %v2544
      %2722 = vst.msk [vmem:[%s166 + $0x4d0] sm:$0xff] %vm2567, %v2545
      %2723 = vst.msk [vmem:[%s166 + $0x4d8] sm:$0xff] %vm2567, %v2546
      %2724 = vst.msk [vmem:[%s166 + $0x4e0] sm:$0xff] %vm2567, %v2547
      %2725 = vst.msk [vmem:[%s166 + $0x4e8] sm:$0xff] %vm2567, %v2548
      %2726 = vst.msk [vmem:[%s166 + $0x4f0] sm:$0xff] %vm2567, %v2549
      %2727 = vst.msk [vmem:[%s166 + $0x4f8] sm:$0xff] %vm2567, %v2550
      %2728 = vst.msk [vmem:[%s166 + $0x500] sm:$0xff] %vm2567, %v2551
      %2729 = vst.msk [vmem:[%s166 + $0x508] sm:$0xff] %vm2567, %v2552
      %2730 = vst.msk [vmem:[%s166 + $0x510] sm:$0xff] %vm2567, %v2553
      %2731 = vst.msk [vmem:[%s166 + $0x518] sm:$0xff] %vm2567, %v2554
      %2732 = vst.msk [vmem:[%s166 + $0x520] sm:$0xff] %vm2567, %v2555
      %2733 = vst.msk [vmem:[%s166 + $0x528] sm:$0xff] %vm2567, %v2556
      %2734 = vst.msk [vmem:[%s166 + $0x530] sm:$0xff] %vm2567, %v2557
      %2735 = vst.msk [vmem:[%s166 + $0x538] sm:$0xff] %vm2567, %v2558
      %2736 = vst.msk [vmem:[%s166 + $0x540] sm:$0xff] %vm2567, %v2559
      %2737 = vst.msk [vmem:[%s166 + $0x548] sm:$0xff] %vm2567, %v2560
      %2738 = vst.msk [vmem:[%s166 + $0x550] sm:$0xff] %vm2567, %v2561
      %2739 = vst.msk [vmem:[%s166 + $0x558] sm:$0xff] %vm2567, %v2562
      %2740 = vst.msk [vmem:[%s166 + $0x560] sm:$0xff] %vm2567, %v2563
      %2741 = vst.msk [vmem:[%s166 + $0x568] sm:$0xff] %vm2567, %v2564
      %2742 = vst.msk [vmem:[%s166 + $0x570] sm:$0xff] %vm2567, %v2565
      %2743 = vst.msk [vmem:[%s166 + $0x578] sm:$0xff] %vm2567, %v2566
      %p2744 = scmp.lt.s32.totalorder %s17, 1
      %s2745 = scalar_select %p2744, %s17, 1
      %s2746 = smul.addr %s2745, 176
      %s2747 = smul.addr %s2746, 8
      %s2748 = scalar_lea.vmem %s2, %s2747
      // Predicated region
      $region33: #{tpu_custom_call.1} parent=27 // pred_check
        %p2749 = pneg %p92
      $region34: #{tpu_custom_call.1} parent=27 // pred_check_branch
        %2751 = sbr.rel (%p2749) target = $region36
      $region35: #{tpu_custom_call.1} parent=27 // pred_region
        _
      $region36: #{tpu_custom_call.1} parent=27 // pred_fallthru
        _
    $region28: #{tpu_custom_call.1} parent=5 // pred_fallthru
      _
    %p2752 = scmp.le.s32.totalorder 2, %s8
    // Predicated region
    $region37: #{tpu_custom_call.1} parent=5 // pred_check
      %p2753 = pneg %p2752
    $region38: #{tpu_custom_call.1} parent=5 // pred_check_branch
      %2755 = sbr.rel (%p2753) target = $region40
    $region39: #{tpu_custom_call.1} parent=5 // pred_region
      %s2756 = ssub.s32 %s8, 2
      // Predicated region
      $region41: #{tpu_custom_call.1} parent=39 // pred_check
        %p2757 = pneg %p98
      $region42: #{tpu_custom_call.1} parent=39 // pred_check_branch
        %2759 = sbr.rel (%p2757) target = $region44
      $region43: #{tpu_custom_call.1} parent=39 // pred_region
        %p2760 = scmp.lt.s32.totalorder %s19, 1
        %s2761 = scalar_select %p2760, %s19, 1
        %s2762 = smul.addr %s2761, 176
        %s2763 = smul.addr %s2762, 8
        %s2764 = scalar_lea.vmem %s2, %s2763
      $region44: #{tpu_custom_call.1} parent=39 // pred_fallthru
        _
    $region40: #{tpu_custom_call.1} parent=5 // pred_fallthru
      _
  $region6: #{tpu_custom_call.1} parent=0 // loop_footer
    %s12 = sadd.s32 1, %s8
  $region7: #{tpu_custom_call.1} parent=0 // loop_footer_branch
    %7 = sbr.rel target = $region3
  $region8: #{tpu_custom_call.1} parent=0 // loop_exit
    _

</llo_original>
